<compile_context>
chip_gen: v7x
topology: tpu7x:2x2x1
jax: 0.10.0
libtpu: 0.0.40
codegen_flags: <defaults>
</compile_context>

<pallas_src>
import jax
import jax.numpy as jnp
import numpy as np
from jax.experimental import pallas as pl
from jax.experimental.pallas import tpu as pltpu


# ----------------------------- Pallas kernel ------------------------------ #
def grud_kernel(seq_ref,                          # (3, tb*B, V) f32: x, m, dt (time-major flattened)
                wgx_ref, bgx_ref,                 # (V, V) f32, (1, V) f32   decay -> x
                wgh_ref, bgh_ref,                 # (V, H) f32, (1, H) f32   decay -> h
                wxg_ref, wmg_ref, bg_ref,         # (V, 3H) bf16, (V, 3H) bf16, (1, 3H) f32
                whg_ref, whh_ref,                 # (H, 2H) bf16, (H, H) bf16  (in-loop weights)
                out_ref,                          # (tb, B, H) f32
                h_scr, xp_scr, smx_scr, sm_scr,   # block-boundary carries
                xn_scr):                          # (tb*B, V) staging for batched xn matmul
    blk = pl.program_id(0)

    # Initialize the cross-block carries on the first time block only.
    @pl.when(blk == 0)
    def _():
        h_scr[...] = jnp.zeros_like(h_scr)
        xp_scr[...] = jnp.zeros_like(xp_scr)
        smx_scr[...] = jnp.zeros_like(smx_scr)
        sm_scr[...] = jnp.zeros_like(sm_scr)

    B, H = h_scr.shape
    V = xp_scr.shape[1]
    TB = seq_ref.shape[1] // B            # timesteps in this block (static)
    bf16 = jnp.bfloat16
    f32 = jnp.float32

    x_all = seq_ref[0]                    # (TB*B, V)
    m_all = seq_ref[1]                    # (TB*B, V)
    dt_all = seq_ref[2]                   # (TB*B, V)

    # ---- Phase 1: batched input-only decay & mask projections (M = TB*B) ----
    # Decay stays in f32: large dt through bf16 visibly shifts exp(-relu(.)).
    delta_x_all = jnp.exp(-jnp.maximum(
        0.0, jnp.dot(dt_all, wgx_ref[...], preferred_element_type=f32) + bgx_ref[...]))
    delta_h_all = jnp.exp(-jnp.maximum(
        0.0, jnp.dot(dt_all, wgh_ref[...], preferred_element_type=f32) + bgh_ref[...]))
    a_m_all = jnp.dot(m_all.astype(bf16), wmg_ref[...],
                      preferred_element_type=f32)                      # (TB*B, 3H)

    # ---- Phase 2: input-only elementwise scan (VPU); state carried in regs ----
    xp = xp_scr[...]
    smx = smx_scr[...]
    sm = sm_scr[...]
    for t in range(TB):                   # static unroll, bounded by the time block
        lo = t * B
        x = x_all[lo:lo + B]
        m = m_all[lo:lo + B]
        dx = delta_x_all[lo:lo + B]
        smx = smx + m * x
        sm = sm + m
        has_obs = sm > 0.0
        x_mean = jnp.where(
            has_obs,
            smx * pl.reciprocal(jnp.where(has_obs, sm, 1.0), approx=True),
            0.0)
        xp = m * x + (1.0 - m) * xp
        xn = m * x + (1.0 - m) * (dx * xp + (1.0 - dx) * x_mean)
        xn_scr[lo:lo + B, :] = xn
    xp_scr[...] = xp
    smx_scr[...] = smx
    sm_scr[...] = sm

    # ---- Phase 3: batched xn projection; lane-split ONCE outside the loop ----
    a_all = (jnp.dot(xn_scr[...].astype(bf16), wxg_ref[...],
                     preferred_element_type=f32)
             + a_m_all + bg_ref[...])                                  # (TB*B, 3H)
    a_r_all = a_all[:, :H]
    a_z_all = a_all[:, H:2 * H]
    a_h_all = a_all[:, 2 * H:]

    # ---- Phase 4: serial h recurrence — only 2 small MXU pushes per step ----
    h = h_scr[...]                        # stays in vregs across the unrolled loop
    for t in range(TB):
        lo = t * B
        hdec = delta_h_all[lo:lo + B] * h
        # Weight refs read at the call sites (bounded live range; streamed from VMEM).
        ah = jnp.dot(hdec.astype(bf16), whg_ref[...],
                     preferred_element_type=f32)                       # (B, 2H)
        r = jax.nn.sigmoid(a_r_all[lo:lo + B] + ah[:, :H])
        z = jax.nn.sigmoid(a_z_all[lo:lo + B] + ah[:, H:])
        h_tilde = jnp.tanh(
            a_h_all[lo:lo + B]
            + jnp.dot((r * hdec).astype(bf16), whh_ref[...],
                      preferred_element_type=f32))
        h = (1.0 - z) * hdec + z * h_tilde
        # TODO(synk): at production sizes pad H to a 128 multiple so this store
        # is an unmasked lane-dense vst.
        out_ref[t] = h
    h_scr[...] = h


# ------------------------------ wrapper ----------------------------------- #
def _pick_time_block(T, B):
    """Prefer >=4 grid steps (pipelining) with sublane-aligned per-block rows."""
    for nblk in (8, 4, 2, 1):
        if T % nblk == 0:
            tb = T // nblk
            if (tb * B) % 8 == 0 or nblk == 1:
                return tb
    return T


def grud_forward(vals, masks, past, params, time_block=None, vmem_limit_bytes=None):
    """vals/masks/past: (T, B, V) float32.  Returns (T, B, H) float32."""
    T, B, V = vals.shape
    H = params["wgh"].shape[1]
    tb = _pick_time_block(T, B) if time_block is None else time_block
    assert T % tb == 0, "time_block must divide T"
    assert (tb * B) % 8 == 0 or tb == T, "tb*B must be sublane (8) aligned"

    # One fused, pre-flattened input stream: (3, T*B, V).  Batched matmul
    # operands become plain 2-D blocks (no in-kernel reshape), one DMA / block.
    seq = jnp.stack([vals, masks, past], axis=0).reshape(3, T * B, V)

    bf16 = jnp.bfloat16
    # Decay weights stay f32 (fidelity); gate weights fused along N and cast bf16.
    w_gx, b_gx = params["wgx"], params["bgx"]
    w_gh, b_gh = params["wgh"], params["bgh"]
    w_xg = jnp.concatenate([params["wrx"], params["wzx"], params["whx"]], axis=1).astype(bf16)
    w_mg = jnp.concatenate([params["wrm"], params["wzm"], params["whm"]], axis=1).astype(bf16)
    b_g = jnp.concatenate([params["br"], params["bz"], params["bh"]], axis=1)
    w_hg = jnp.concatenate([params["wrh"], params["wzh"]], axis=1).astype(bf16)
    w_hh = params["whh"].astype(bf16)

    def const_spec(shape):
        # TODO(synk): at production V/H on v7x, use pipeline_mode=pl.Buffered(1)
        # here (loop-invariant weights) to halve their VMEM footprint.
        return pl.BlockSpec(shape, lambda b: (0,) * len(shape))

    in_specs = [
        pl.BlockSpec((3, tb * B, V), lambda b: (0, b, 0)),   # fused x/m/dt block
        const_spec((V, V)), const_spec((1, V)),              # decay -> x
        const_spec((V, H)), const_spec((1, H)),              # decay -> h
        const_spec((V, 3 * H)), const_spec((V, 3 * H)), const_spec((1, 3 * H)),
        const_spec((H, 2 * H)), const_spec((H, H)),          # in-loop weights
    ]
    out_spec = pl.BlockSpec((tb, B, H), lambda b: (b, 0, 0))

    compiler_kwargs = dict(dimension_semantics=("arbitrary",))   # sequential recurrence
    if vmem_limit_bytes is not None:
        compiler_kwargs["vmem_limit_bytes"] = vmem_limit_bytes

    return pl.pallas_call(
        grud_kernel,
        out_shape=jax.ShapeDtypeStruct((T, B, H), jnp.float32),
        grid_spec=pltpu.PrefetchScalarGridSpec(
            num_scalar_prefetch=0,
            grid=(T // tb,),
            in_specs=in_specs,
            out_specs=out_spec,
            scratch_shapes=[
                pltpu.VMEM((B, H), jnp.float32),        # h carry
                pltpu.VMEM((B, V), jnp.float32),        # x_prime carry
                pltpu.VMEM((B, V), jnp.float32),        # sum(m*x) carry
                pltpu.VMEM((B, V), jnp.float32),        # sum(m) carry
                pltpu.VMEM((tb * B, V), jnp.float32),   # xn staging (batched matmul lhs)
            ]),
        compiler_params=pltpu.CompilerParams(**compiler_kwargs),
    )(seq, w_gx, b_gx, w_gh, b_gh, w_xg, w_mg, b_g, w_hg, w_hh)


# --------------------------- parameter setup ------------------------------ #
def init_params(key, ninp, nhid):
    """Deterministic init matching nn.Linear shapes (weights stored transposed)."""
    combined = nhid + 2 * ninp
    keys = jax.random.split(key, 10)

    def linear(kw, kb, in_dim, out_dim):
        bound = 1.0 / np.sqrt(in_dim)
        w = jax.random.uniform(kw, (in_dim, out_dim), jnp.float32, -bound, bound)
        b = jax.random.uniform(kb, (1, out_dim), jnp.float32, -bound, bound)
        return w, b

    wz, bz = linear(keys[0], keys[1], combined, nhid)
    wr, br = linear(keys[2], keys[3], combined, nhid)
    wh, bh = linear(keys[4], keys[5], combined, nhid)
    wgx, bgx = linear(keys[6], keys[7], ninp, ninp)
    wgh, bgh = linear(keys[8], keys[9], ninp, nhid)

    def split(w):  # combined order in torch: cat((x, h, m), dim=1)
        return w[:ninp], w[ninp:ninp + nhid], w[ninp + nhid:]

    wzx, wzh, wzm = split(wz)
    wrx, wrh, wrm = split(wr)
    whx, whh, whm = split(wh)
    return dict(wgx=wgx, bgx=bgx, wgh=wgh, bgh=bgh,
                wrx=wrx, wrh=wrh, wrm=wrm, br=br,
                wzx=wzx, wzh=wzh, wzm=wzm, bz=bz,
                whx=whx, whh=whh, whm=whm, bh=bh)


def unpack(vals_btv, masks_btv, past_btv):
    """Replicates GRUD_Layer.unpack: transpose to time-major + NaN handling."""
    vals = jnp.transpose(vals_btv, (1, 0, 2)).astype(jnp.float32)
    masks = jnp.transpose(masks_btv, (1, 0, 2)).astype(jnp.float32)
    past = jnp.transpose(past_btv, (1, 0, 2)).astype(jnp.float32)
    past = jnp.where(jnp.isnan(past), 0.0, past)
    vals = jnp.where(jnp.isnan(vals), 0.0, vals)
    masks = jnp.where(jnp.isnan(masks), 1.0, masks)
    return vals, masks, past


# --------------------------- pure-JAX reference ---------------------------- #
def grud_reference(vals, masks, past, p):
    T, B, V = vals.shape
    H = p["wgh"].shape[1]
    h = jnp.zeros((B, H), jnp.float32)
    x_prime = jnp.zeros((B, V), jnp.float32)
    smx = jnp.zeros((B, V), jnp.float32)
    sm = jnp.zeros((B, V), jnp.float32)
    outs = []
    for t in range(T):
        x, m, dt = vals[t], masks[t], past[t]
        smx, sm = smx + m * x, sm + m
        x_mean = smx / sm
        x_mean = jnp.where(jnp.isnan(x_mean), 0.0, x_mean)
        delta_x = jnp.exp(-jnp.maximum(0.0, dt @ p["wgx"] + p["bgx"]))
        delta_h = jnp.exp(-jnp.maximum(0.0, dt @ p["wgh"] + p["bgh"]))
        h = delta_h * h
        x_prime = m * x + (1 - m) * x_prime
        xn = m * x + (1 - m) * (delta_x * x_prime + (1 - delta_x) * x_mean)
        r = jax.nn.sigmoid(xn @ p["wrx"] + h @ p["wrh"] + m @ p["wrm"] + p["br"])
        z = jax.nn.sigmoid(xn @ p["wzx"] + h @ p["wzh"] + m @ p["wzm"] + p["bz"])
        h_tilde = jnp.tanh(xn @ p["whx"] + (r * h) @ p["whh"] + m @ p["whm"] + p["bh"])
        h = (1 - z) * h + z * h_tilde
        outs.append(h)
    return jnp.stack(outs)


# --------------------------------- main ------------------------------------ #
if __name__ == "__main__":
    B, T, NINP, NHID = 4, 8, 8, 32

    key = jax.random.PRNGKey(0)
    k_vals, k_masks, k_past, k_params = jax.random.split(key, 4)

    # Module-style inputs: (B, T, V), as expected before the internal transpose.
    vals_btv = jax.random.normal(k_vals, (B, T, NINP), jnp.float32)
    masks_btv = (jax.random.uniform(k_masks, (B, T, NINP)) > 0.4).astype(jnp.float32)
    past_btv = jax.random.uniform(k_past, (B, T, NINP), jnp.float32) * 2.0

    params = init_params(k_params, NINP, NHID)
    vals, masks, past = unpack(vals_btv, masks_btv, past_btv)  # (T, B, V)

    ref = jax.block_until_ready(grud_reference(vals, masks, past, params))

    # Default: time_block=2 -> grid=(4,), pipelined, state carried across blocks.
    out = jax.block_until_ready(grud_forward(vals, masks, past, params))
    assert out.shape == (T, B, NHID), out.shape
    np.testing.assert_allclose(np.asarray(out), np.asarray(ref), rtol=5e-2, atol=5e-2)

    # Bigger time block: grid=(2,).
    out_tb4 = jax.block_until_ready(
        grud_forward(vals, masks, past, params, time_block=4))
    np.testing.assert_allclose(np.asarray(out_tb4), np.asarray(ref), rtol=5e-2, atol=5e-2)

    # Whole sequence in one grid step: grid=(1,).
    out_full = jax.block_until_ready(
        grud_forward(vals, masks, past, params, time_block=T))
    np.testing.assert_allclose(np.asarray(out_full), np.asarray(ref), rtol=5e-2, atol=5e-2)

    print("KERNEL_OK")
</pallas_src>

<mosaic_0001>
module attributes {stable_mosaic.version = 11 : i64} {
  func.func @grud_kernel(%arg0: i32, %arg1: memref<3x8x8xf32, #tpu.memory_space<vmem>>, %arg2: memref<8x8xf32, #tpu.memory_space<vmem>>, %arg3: memref<1x8xf32, #tpu.memory_space<vmem>>, %arg4: memref<8x32xf32, #tpu.memory_space<vmem>>, %arg5: memref<1x32xf32, #tpu.memory_space<vmem>>, %arg6: memref<8x96xbf16, #tpu.memory_space<vmem>>, %arg7: memref<8x96xbf16, #tpu.memory_space<vmem>>, %arg8: memref<1x96xf32, #tpu.memory_space<vmem>>, %arg9: memref<32x64xbf16, #tpu.memory_space<vmem>>, %arg10: memref<32x32xbf16, #tpu.memory_space<vmem>>, %arg11: memref<2x4x32xf32, #tpu.memory_space<vmem>>, %arg12: memref<4x32xf32, #tpu.memory_space<vmem>>, %arg13: memref<4x8xf32, #tpu.memory_space<vmem>>, %arg14: memref<4x8xf32, #tpu.memory_space<vmem>>, %arg15: memref<4x8xf32, #tpu.memory_space<vmem>>, %arg16: memref<8x8xf32, #tpu.memory_space<vmem>>) attributes {dimension_semantics = [#tpu.dimension_semantics<arbitrary>], iteration_bounds = array<i64: 4>, scalar_prefetch = 0 : i64, scratch_operands = 5 : i64, tpu.core_type = #tpu.core_type<tc>, window_params = [{transform_indices = @transform_0, window_bounds = array<i64: 3, 8, 8>}, {pipeline_mode = #tpu.pipeline_mode<synchronous>, transform_indices = @transform_1, window_bounds = array<i64: 8, 8>}, {pipeline_mode = #tpu.pipeline_mode<synchronous>, transform_indices = @transform_2, window_bounds = array<i64: 1, 8>}, {pipeline_mode = #tpu.pipeline_mode<synchronous>, transform_indices = @transform_3, window_bounds = array<i64: 8, 32>}, {pipeline_mode = #tpu.pipeline_mode<synchronous>, transform_indices = @transform_4, window_bounds = array<i64: 1, 32>}, {pipeline_mode = #tpu.pipeline_mode<synchronous>, transform_indices = @transform_5, window_bounds = array<i64: 8, 96>}, {pipeline_mode = #tpu.pipeline_mode<synchronous>, transform_indices = @transform_6, window_bounds = array<i64: 8, 96>}, {pipeline_mode = #tpu.pipeline_mode<synchronous>, transform_indices = @transform_7, window_bounds = array<i64: 1, 96>}, {pipeline_mode = #tpu.pipeline_mode<synchronous>, transform_indices = @transform_8, window_bounds = array<i64: 32, 64>}, {pipeline_mode = #tpu.pipeline_mode<synchronous>, transform_indices = @transform_9, window_bounds = array<i64: 32, 32>}, {transform_indices = @transform_10, window_bounds = array<i64: 2, 4, 32>}]} {
    %c0_i32 = arith.constant 0 : i32
    %0 = arith.cmpi eq, %arg0, %c0_i32 : i32
    %1 = arith.extui %0 : i1 to i32
    %c0_i32_0 = arith.constant 0 : i32
    %2 = arith.cmpi ne, %1, %c0_i32_0 : i32
    scf.if %2 {
      %cst_85 = arith.constant 0.000000e+00 : f32
      %183 = vector.broadcast %cst_85 : f32 to vector<4x32xf32>
      %c0_86 = arith.constant 0 : index
      %c0_87 = arith.constant 0 : index
      %184 = vector.load %arg12[%c0_86, %c0_87] : memref<4x32xf32, #tpu.memory_space<vmem>>, vector<4x32xf32>
      tpu.vector_store %arg12[%c0_86, %c0_87], %183 {strides = array<i32>} : memref<4x32xf32, #tpu.memory_space<vmem>>, vector<4x32xf32>,
      %cst_88 = arith.constant 0.000000e+00 : f32
      %185 = vector.broadcast %cst_88 : f32 to vector<4x8xf32>
      %c0_89 = arith.constant 0 : index
      %c0_90 = arith.constant 0 : index
      %186 = vector.load %arg13[%c0_89, %c0_90] : memref<4x8xf32, #tpu.memory_space<vmem>>, vector<4x8xf32>
      tpu.vector_store %arg13[%c0_89, %c0_90], %185 {strides = array<i32>} : memref<4x8xf32, #tpu.memory_space<vmem>>, vector<4x8xf32>,
      %cst_91 = arith.constant 0.000000e+00 : f32
      %187 = vector.broadcast %cst_91 : f32 to vector<4x8xf32>
      %c0_92 = arith.constant 0 : index
      %c0_93 = arith.constant 0 : index
      %188 = vector.load %arg14[%c0_92, %c0_93] : memref<4x8xf32, #tpu.memory_space<vmem>>, vector<4x8xf32>
      tpu.vector_store %arg14[%c0_92, %c0_93], %187 {strides = array<i32>} : memref<4x8xf32, #tpu.memory_space<vmem>>, vector<4x8xf32>,
      %cst_94 = arith.constant 0.000000e+00 : f32
      %189 = vector.broadcast %cst_94 : f32 to vector<4x8xf32>
      %c0_95 = arith.constant 0 : index
      %c0_96 = arith.constant 0 : index
      %190 = vector.load %arg15[%c0_95, %c0_96] : memref<4x8xf32, #tpu.memory_space<vmem>>, vector<4x8xf32>
      tpu.vector_store %arg15[%c0_95, %c0_96], %189 {strides = array<i32>} : memref<4x8xf32, #tpu.memory_space<vmem>>, vector<4x8xf32>,
    } else {
    }
    %c0 = arith.constant 0 : index
    %c0_1 = arith.constant 0 : index
    %c0_2 = arith.constant 0 : index
    %3 = vector.load %arg1[%c0, %c0_1, %c0_2] : memref<3x8x8xf32, #tpu.memory_space<vmem>>, vector<1x8x8xf32>
    %4 = vector.shape_cast %3 : vector<1x8x8xf32> to vector<8x8xf32>
    %c1 = arith.constant 1 : index
    %c0_3 = arith.constant 0 : index
    %c0_4 = arith.constant 0 : index
    %5 = vector.load %arg1[%c1, %c0_3, %c0_4] : memref<3x8x8xf32, #tpu.memory_space<vmem>>, vector<1x8x8xf32>
    %6 = vector.shape_cast %5 : vector<1x8x8xf32> to vector<8x8xf32>
    %c2 = arith.constant 2 : index
    %c0_5 = arith.constant 0 : index
    %c0_6 = arith.constant 0 : index
    %7 = vector.load %arg1[%c2, %c0_5, %c0_6] : memref<3x8x8xf32, #tpu.memory_space<vmem>>, vector<1x8x8xf32>
    %8 = vector.shape_cast %7 : vector<1x8x8xf32> to vector<8x8xf32>
    %c0_7 = arith.constant 0 : index
    %c0_8 = arith.constant 0 : index
    %9 = vector.load %arg2[%c0_7, %c0_8] : memref<8x8xf32, #tpu.memory_space<vmem>>, vector<8x8xf32>
    %cst = arith.constant dense<0.000000e+00> : vector<8x8xf32>
    %10 = tpu.matmul %8, %9, %cst {dimension_numbers = #tpu.dot_dimension_numbers<[1], [0], [0], [1], [0, 0, 1, 1], [], []>} : vector<8x8xf32>, vector<8x8xf32>, vector<8x8xf32> -> vector<8x8xf32>
    %c0_9 = arith.constant 0 : index
    %c0_10 = arith.constant 0 : index
    %11 = vector.load %arg3[%c0_9, %c0_10] : memref<1x8xf32, #tpu.memory_space<vmem>>, vector<1x8xf32>
    %12 = vector.broadcast %11 : vector<1x8xf32> to vector<8x8xf32>
    %13 = arith.addf %10, %12 : vector<8x8xf32>
    %cst_11 = arith.constant 0.000000e+00 : f32
    %14 = vector.broadcast %cst_11 : f32 to vector<8x8xf32>
    %15 = arith.maximumf %14, %13 : vector<8x8xf32>
    %cst_12 = arith.constant 0.000000e+00 : f32
    %16 = vector.broadcast %cst_12 : f32 to vector<8x8xf32>
    %17 = arith.subf %16, %15 : vector<8x8xf32>
    %18 = math.exp %17 : vector<8x8xf32>
    %c0_13 = arith.constant 0 : index
    %c0_14 = arith.constant 0 : index
    %19 = vector.load %arg4[%c0_13, %c0_14] : memref<8x32xf32, #tpu.memory_space<vmem>>, vector<8x32xf32>
    %cst_15 = arith.constant dense<0.000000e+00> : vector<8x32xf32>
    %20 = tpu.matmul %8, %19, %cst_15 {dimension_numbers = #tpu.dot_dimension_numbers<[1], [0], [0], [1], [0, 0, 1, 1], [], []>} : vector<8x8xf32>, vector<8x32xf32>, vector<8x32xf32> -> vector<8x32xf32>
    %c0_16 = arith.constant 0 : index
    %c0_17 = arith.constant 0 : index
    %21 = vector.load %arg5[%c0_16, %c0_17] : memref<1x32xf32, #tpu.memory_space<vmem>>, vector<1x32xf32>
    %22 = vector.broadcast %21 : vector<1x32xf32> to vector<8x32xf32>
    %23 = arith.addf %20, %22 : vector<8x32xf32>
    %cst_18 = arith.constant 0.000000e+00 : f32
    %24 = vector.broadcast %cst_18 : f32 to vector<8x32xf32>
    %25 = arith.maximumf %24, %23 : vector<8x32xf32>
    %cst_19 = arith.constant 0.000000e+00 : f32
    %26 = vector.broadcast %cst_19 : f32 to vector<8x32xf32>
    %27 = arith.subf %26, %25 : vector<8x32xf32>
    %28 = math.exp %27 : vector<8x32xf32>
    %29 = arith.truncf %6 : vector<8x8xf32> to vector<8x8xbf16>
    %c0_20 = arith.constant 0 : index
    %c0_21 = arith.constant 0 : index
    %30 = vector.load %arg7[%c0_20, %c0_21] : memref<8x96xbf16, #tpu.memory_space<vmem>>, vector<8x96xbf16>
    %cst_22 = arith.constant dense<0.000000e+00> : vector<8x96xf32>
    %31 = tpu.matmul %29, %30, %cst_22 {dimension_numbers = #tpu.dot_dimension_numbers<[1], [0], [0], [1], [0, 0, 1, 1], [], []>} : vector<8x8xbf16>, vector<8x96xbf16>, vector<8x96xf32> -> vector<8x96xf32>
    %c0_23 = arith.constant 0 : index
    %c0_24 = arith.constant 0 : index
    %32 = vector.load %arg13[%c0_23, %c0_24] : memref<4x8xf32, #tpu.memory_space<vmem>>, vector<4x8xf32>
    %c0_25 = arith.constant 0 : index
    %c0_26 = arith.constant 0 : index
    %33 = vector.load %arg14[%c0_25, %c0_26] : memref<4x8xf32, #tpu.memory_space<vmem>>, vector<4x8xf32>
    %c0_27 = arith.constant 0 : index
    %c0_28 = arith.constant 0 : index
    %34 = vector.load %arg15[%c0_27, %c0_28] : memref<4x8xf32, #tpu.memory_space<vmem>>, vector<4x8xf32>
    %35 = vector.extract_strided_slice %4 {offsets = [0, 0], sizes = [4, 8], strides = [1, 1]} : vector<8x8xf32> to vector<4x8xf32>
    %36 = vector.extract_strided_slice %6 {offsets = [0, 0], sizes = [4, 8], strides = [1, 1]} : vector<8x8xf32> to vector<4x8xf32>
    %37 = vector.extract_strided_slice %18 {offsets = [0, 0], sizes = [4, 8], strides = [1, 1]} : vector<8x8xf32> to vector<4x8xf32>
    %38 = arith.mulf %36, %35 : vector<4x8xf32>
    %39 = arith.addf %33, %38 : vector<4x8xf32>
    %40 = arith.addf %34, %36 : vector<4x8xf32>
    %cst_29 = arith.constant 0.000000e+00 : f32
    %41 = vector.broadcast %cst_29 : f32 to vector<4x8xf32>
    %42 = arith.cmpf ogt, %40, %41 : vector<4x8xf32>
    %cst_30 = arith.constant 1.000000e+00 : f32
    %43 = vector.broadcast %cst_30 : f32 to vector<4x8xf32>
    %44 = arith.select %42, %40, %43 : vector<4x8xi1>, vector<4x8xf32>
    %45 = tpu.reciprocal %44 {approx = true} : vector<4x8xf32> -> vector<4x8xf32>
    %46 = arith.mulf %39, %45 : vector<4x8xf32>
    %cst_31 = arith.constant 0.000000e+00 : f32
    %47 = vector.broadcast %cst_31 : f32 to vector<4x8xf32>
    %48 = arith.select %42, %46, %47 : vector<4x8xi1>, vector<4x8xf32>
    %49 = arith.mulf %36, %35 : vector<4x8xf32>
    %cst_32 = arith.constant 1.000000e+00 : f32
    %50 = vector.broadcast %cst_32 : f32 to vector<4x8xf32>
    %51 = arith.subf %50, %36 : vector<4x8xf32>
    %52 = arith.mulf %51, %32 : vector<4x8xf32>
    %53 = arith.addf %49, %52 : vector<4x8xf32>
    %54 = arith.mulf %36, %35 : vector<4x8xf32>
    %cst_33 = arith.constant 1.000000e+00 : f32
    %55 = vector.broadcast %cst_33 : f32 to vector<4x8xf32>
    %56 = arith.subf %55, %36 : vector<4x8xf32>
    %57 = arith.mulf %37, %53 : vector<4x8xf32>
    %cst_34 = arith.constant 1.000000e+00 : f32
    %58 = vector.broadcast %cst_34 : f32 to vector<4x8xf32>
    %59 = arith.subf %58, %37 : vector<4x8xf32>
    %60 = arith.mulf %59, %48 : vector<4x8xf32>
    %61 = arith.addf %57, %60 : vector<4x8xf32>
    %62 = arith.mulf %56, %61 : vector<4x8xf32>
    %63 = arith.addf %54, %62 : vector<4x8xf32>
    %c0_35 = arith.constant 0 : index
    %c0_36 = arith.constant 0 : index
    %64 = vector.load %arg16[%c0_35, %c0_36] : memref<8x8xf32, #tpu.memory_space<vmem>>, vector<4x8xf32>
    tpu.vector_store %arg16[%c0_35, %c0_36], %63 {strides = array<i32>} : memref<8x8xf32, #tpu.memory_space<vmem>>, vector<4x8xf32>,
    %65 = vector.extract_strided_slice %4 {offsets = [4, 0], sizes = [4, 8], strides = [1, 1]} : vector<8x8xf32> to vector<4x8xf32>
    %66 = vector.extract_strided_slice %6 {offsets = [4, 0], sizes = [4, 8], strides = [1, 1]} : vector<8x8xf32> to vector<4x8xf32>
    %67 = vector.extract_strided_slice %18 {offsets = [4, 0], sizes = [4, 8], strides = [1, 1]} : vector<8x8xf32> to vector<4x8xf32>
    %68 = arith.mulf %66, %65 : vector<4x8xf32>
    %69 = arith.addf %39, %68 : vector<4x8xf32>
    %70 = arith.addf %40, %66 : vector<4x8xf32>
    %cst_37 = arith.constant 0.000000e+00 : f32
    %71 = vector.broadcast %cst_37 : f32 to vector<4x8xf32>
    %72 = arith.cmpf ogt, %70, %71 : vector<4x8xf32>
    %cst_38 = arith.constant 1.000000e+00 : f32
    %73 = vector.broadcast %cst_38 : f32 to vector<4x8xf32>
    %74 = arith.select %72, %70, %73 : vector<4x8xi1>, vector<4x8xf32>
    %75 = tpu.reciprocal %74 {approx = true} : vector<4x8xf32> -> vector<4x8xf32>
    %76 = arith.mulf %69, %75 : vector<4x8xf32>
    %cst_39 = arith.constant 0.000000e+00 : f32
    %77 = vector.broadcast %cst_39 : f32 to vector<4x8xf32>
    %78 = arith.select %72, %76, %77 : vector<4x8xi1>, vector<4x8xf32>
    %79 = arith.mulf %66, %65 : vector<4x8xf32>
    %cst_40 = arith.constant 1.000000e+00 : f32
    %80 = vector.broadcast %cst_40 : f32 to vector<4x8xf32>
    %81 = arith.subf %80, %66 : vector<4x8xf32>
    %82 = arith.mulf %81, %53 : vector<4x8xf32>
    %83 = arith.addf %79, %82 : vector<4x8xf32>
    %84 = arith.mulf %66, %65 : vector<4x8xf32>
    %cst_41 = arith.constant 1.000000e+00 : f32
    %85 = vector.broadcast %cst_41 : f32 to vector<4x8xf32>
    %86 = arith.subf %85, %66 : vector<4x8xf32>
    %87 = arith.mulf %67, %83 : vector<4x8xf32>
    %cst_42 = arith.constant 1.000000e+00 : f32
    %88 = vector.broadcast %cst_42 : f32 to vector<4x8xf32>
    %89 = arith.subf %88, %67 : vector<4x8xf32>
    %90 = arith.mulf %89, %78 : vector<4x8xf32>
    %91 = arith.addf %87, %90 : vector<4x8xf32>
    %92 = arith.mulf %86, %91 : vector<4x8xf32>
    %93 = arith.addf %84, %92 : vector<4x8xf32>
    %c4 = arith.constant 4 : index
    %c0_43 = arith.constant 0 : index
    %94 = vector.load %arg16[%c4, %c0_43] : memref<8x8xf32, #tpu.memory_space<vmem>>, vector<4x8xf32>
    tpu.vector_store %arg16[%c4, %c0_43], %93 {strides = array<i32>} : memref<8x8xf32, #tpu.memory_space<vmem>>, vector<4x8xf32>,
    %c0_44 = arith.constant 0 : index
    %c0_45 = arith.constant 0 : index
    %95 = vector.load %arg13[%c0_44, %c0_45] : memref<4x8xf32, #tpu.memory_space<vmem>>, vector<4x8xf32>
    tpu.vector_store %arg13[%c0_44, %c0_45], %83 {strides = array<i32>} : memref<4x8xf32, #tpu.memory_space<vmem>>, vector<4x8xf32>,
    %c0_46 = arith.constant 0 : index
    %c0_47 = arith.constant 0 : index
    %96 = vector.load %arg14[%c0_46, %c0_47] : memref<4x8xf32, #tpu.memory_space<vmem>>, vector<4x8xf32>
    tpu.vector_store %arg14[%c0_46, %c0_47], %69 {strides = array<i32>} : memref<4x8xf32, #tpu.memory_space<vmem>>, vector<4x8xf32>,
    %c0_48 = arith.constant 0 : index
    %c0_49 = arith.constant 0 : index
    %97 = vector.load %arg15[%c0_48, %c0_49] : memref<4x8xf32, #tpu.memory_space<vmem>>, vector<4x8xf32>
    tpu.vector_store %arg15[%c0_48, %c0_49], %70 {strides = array<i32>} : memref<4x8xf32, #tpu.memory_space<vmem>>, vector<4x8xf32>,
    %c0_50 = arith.constant 0 : index
    %c0_51 = arith.constant 0 : index
    %98 = vector.load %arg16[%c0_50, %c0_51] : memref<8x8xf32, #tpu.memory_space<vmem>>, vector<8x8xf32>
    %99 = arith.truncf %98 : vector<8x8xf32> to vector<8x8xbf16>
    %c0_52 = arith.constant 0 : index
    %c0_53 = arith.constant 0 : index
    %100 = vector.load %arg6[%c0_52, %c0_53] : memref<8x96xbf16, #tpu.memory_space<vmem>>, vector<8x96xbf16>
    %cst_54 = arith.constant dense<0.000000e+00> : vector<8x96xf32>
    %101 = tpu.matmul %99, %100, %cst_54 {dimension_numbers = #tpu.dot_dimension_numbers<[1], [0], [0], [1], [0, 0, 1, 1], [], []>} : vector<8x8xbf16>, vector<8x96xbf16>, vector<8x96xf32> -> vector<8x96xf32>
    %102 = arith.addf %101, %31 : vector<8x96xf32>
    %c0_55 = arith.constant 0 : index
    %c0_56 = arith.constant 0 : index
    %103 = vector.load %arg8[%c0_55, %c0_56] : memref<1x96xf32, #tpu.memory_space<vmem>>, vector<1x96xf32>
    %104 = vector.broadcast %103 : vector<1x96xf32> to vector<8x96xf32>
    %105 = arith.addf %102, %104 : vector<8x96xf32>
    %106 = vector.extract_strided_slice %105 {offsets = [0, 0], sizes = [8, 32], strides = [1, 1]} : vector<8x96xf32> to vector<8x32xf32>
    %107 = vector.extract_strided_slice %105 {offsets = [0, 32], sizes = [8, 32], strides = [1, 1]} : vector<8x96xf32> to vector<8x32xf32>
    %108 = vector.extract_strided_slice %105 {offsets = [0, 64], sizes = [8, 32], strides = [1, 1]} : vector<8x96xf32> to vector<8x32xf32>
    %c0_57 = arith.constant 0 : index
    %c0_58 = arith.constant 0 : index
    %109 = vector.load %arg12[%c0_57, %c0_58] : memref<4x32xf32, #tpu.memory_space<vmem>>, vector<4x32xf32>
    %110 = vector.extract_strided_slice %28 {offsets = [0, 0], sizes = [4, 32], strides = [1, 1]} : vector<8x32xf32> to vector<4x32xf32>
    %111 = arith.mulf %110, %109 : vector<4x32xf32>
    %112 = arith.truncf %111 : vector<4x32xf32> to vector<4x32xbf16>
    %c0_59 = arith.constant 0 : index
    %c0_60 = arith.constant 0 : index
    %113 = vector.load %arg9[%c0_59, %c0_60] : memref<32x64xbf16, #tpu.memory_space<vmem>>, vector<32x64xbf16>
    %cst_61 = arith.constant dense<0.000000e+00> : vector<4x64xf32>
    %114 = tpu.matmul %112, %113, %cst_61 {dimension_numbers = #tpu.dot_dimension_numbers<[1], [0], [0], [1], [0, 0, 1, 1], [], []>} : vector<4x32xbf16>, vector<32x64xbf16>, vector<4x64xf32> -> vector<4x64xf32>
    %115 = vector.extract_strided_slice %106 {offsets = [0, 0], sizes = [4, 32], strides = [1, 1]} : vector<8x32xf32> to vector<4x32xf32>
    %116 = vector.extract_strided_slice %114 {offsets = [0, 0], sizes = [4, 32], strides = [1, 1]} : vector<4x64xf32> to vector<4x32xf32>
    %117 = arith.addf %115, %116 : vector<4x32xf32>
    %118 = arith.negf %117 : vector<4x32xf32>
    %119 = math.exp %118 : vector<4x32xf32>
    %cst_62 = arith.constant 1.000000e+00 : f32
    %120 = vector.broadcast %cst_62 : f32 to vector<4x32xf32>
    %121 = arith.addf %120, %119 : vector<4x32xf32>
    %122 = arith.divf %120, %121 : vector<4x32xf32>
    %123 = vector.extract_strided_slice %107 {offsets = [0, 0], sizes = [4, 32], strides = [1, 1]} : vector<8x32xf32> to vector<4x32xf32>
    %124 = vector.extract_strided_slice %114 {offsets = [0, 32], sizes = [4, 32], strides = [1, 1]} : vector<4x64xf32> to vector<4x32xf32>
    %125 = arith.addf %123, %124 : vector<4x32xf32>
    %126 = arith.negf %125 : vector<4x32xf32>
    %127 = math.exp %126 : vector<4x32xf32>
    %cst_63 = arith.constant 1.000000e+00 : f32
    %128 = vector.broadcast %cst_63 : f32 to vector<4x32xf32>
    %129 = arith.addf %128, %127 : vector<4x32xf32>
    %130 = arith.divf %128, %129 : vector<4x32xf32>
    %131 = vector.extract_strided_slice %108 {offsets = [0, 0], sizes = [4, 32], strides = [1, 1]} : vector<8x32xf32> to vector<4x32xf32>
    %132 = arith.mulf %122, %111 : vector<4x32xf32>
    %133 = arith.truncf %132 : vector<4x32xf32> to vector<4x32xbf16>
    %c0_64 = arith.constant 0 : index
    %c0_65 = arith.constant 0 : index
    %134 = vector.load %arg10[%c0_64, %c0_65] : memref<32x32xbf16, #tpu.memory_space<vmem>>, vector<32x32xbf16>
    %cst_66 = arith.constant dense<0.000000e+00> : vector<4x32xf32>
    %135 = tpu.matmul %133, %134, %cst_66 {dimension_numbers = #tpu.dot_dimension_numbers<[1], [0], [0], [1], [0, 0, 1, 1], [], []>} : vector<4x32xbf16>, vector<32x32xbf16>, vector<4x32xf32> -> vector<4x32xf32>
    %136 = arith.addf %131, %135 : vector<4x32xf32>
    %137 = math.tanh %136 : vector<4x32xf32>
    %cst_67 = arith.constant 1.000000e+00 : f32
    %138 = vector.broadcast %cst_67 : f32 to vector<4x32xf32>
    %139 = arith.subf %138, %130 : vector<4x32xf32>
    %140 = arith.mulf %139, %111 : vector<4x32xf32>
    %141 = arith.mulf %130, %137 : vector<4x32xf32>
    %142 = arith.addf %140, %141 : vector<4x32xf32>
    %c0_68 = arith.constant 0 : index
    %c0_69 = arith.constant 0 : index
    %c0_70 = arith.constant 0 : index
    %143 = vector.load %arg11[%c0_68, %c0_69, %c0_70] : memref<2x4x32xf32, #tpu.memory_space<vmem>>, vector<1x4x32xf32>
    %144 = vector.shape_cast %143 : vector<1x4x32xf32> to vector<4x32xf32>
    %145 = vector.shape_cast %142 : vector<4x32xf32> to vector<1x4x32xf32>
    tpu.vector_store %arg11[%c0_68, %c0_69, %c0_70], %145 {strides = array<i32>} : memref<2x4x32xf32, #tpu.memory_space<vmem>>, vector<1x4x32xf32>,
    %146 = vector.extract_strided_slice %28 {offsets = [4, 0], sizes = [4, 32], strides = [1, 1]} : vector<8x32xf32> to vector<4x32xf32>
    %147 = arith.mulf %146, %142 : vector<4x32xf32>
    %148 = arith.truncf %147 : vector<4x32xf32> to vector<4x32xbf16>
    %c0_71 = arith.constant 0 : index
    %c0_72 = arith.constant 0 : index
    %149 = vector.load %arg9[%c0_71, %c0_72] : memref<32x64xbf16, #tpu.memory_space<vmem>>, vector<32x64xbf16>
    %cst_73 = arith.constant dense<0.000000e+00> : vector<4x64xf32>
    %150 = tpu.matmul %148, %149, %cst_73 {dimension_numbers = #tpu.dot_dimension_numbers<[1], [0], [0], [1], [0, 0, 1, 1], [], []>} : vector<4x32xbf16>, vector<32x64xbf16>, vector<4x64xf32> -> vector<4x64xf32>
    %151 = vector.extract_strided_slice %106 {offsets = [4, 0], sizes = [4, 32], strides = [1, 1]} : vector<8x32xf32> to vector<4x32xf32>
    %152 = vector.extract_strided_slice %150 {offsets = [0, 0], sizes = [4, 32], strides = [1, 1]} : vector<4x64xf32> to vector<4x32xf32>
    %153 = arith.addf %151, %152 : vector<4x32xf32>
    %154 = arith.negf %153 : vector<4x32xf32>
    %155 = math.exp %154 : vector<4x32xf32>
    %cst_74 = arith.constant 1.000000e+00 : f32
    %156 = vector.broadcast %cst_74 : f32 to vector<4x32xf32>
    %157 = arith.addf %156, %155 : vector<4x32xf32>
    %158 = arith.divf %156, %157 : vector<4x32xf32>
    %159 = vector.extract_strided_slice %107 {offsets = [4, 0], sizes = [4, 32], strides = [1, 1]} : vector<8x32xf32> to vector<4x32xf32>
    %160 = vector.extract_strided_slice %150 {offsets = [0, 32], sizes = [4, 32], strides = [1, 1]} : vector<4x64xf32> to vector<4x32xf32>
    %161 = arith.addf %159, %160 : vector<4x32xf32>
    %162 = arith.negf %161 : vector<4x32xf32>
    %163 = math.exp %162 : vector<4x32xf32>
    %cst_75 = arith.constant 1.000000e+00 : f32
    %164 = vector.broadcast %cst_75 : f32 to vector<4x32xf32>
    %165 = arith.addf %164, %163 : vector<4x32xf32>
    %166 = arith.divf %164, %165 : vector<4x32xf32>
    %167 = vector.extract_strided_slice %108 {offsets = [4, 0], sizes = [4, 32], strides = [1, 1]} : vector<8x32xf32> to vector<4x32xf32>
    %168 = arith.mulf %158, %147 : vector<4x32xf32>
    %169 = arith.truncf %168 : vector<4x32xf32> to vector<4x32xbf16>
    %c0_76 = arith.constant 0 : index
    %c0_77 = arith.constant 0 : index
    %170 = vector.load %arg10[%c0_76, %c0_77] : memref<32x32xbf16, #tpu.memory_space<vmem>>, vector<32x32xbf16>
    %cst_78 = arith.constant dense<0.000000e+00> : vector<4x32xf32>
    %171 = tpu.matmul %169, %170, %cst_78 {dimension_numbers = #tpu.dot_dimension_numbers<[1], [0], [0], [1], [0, 0, 1, 1], [], []>} : vector<4x32xbf16>, vector<32x32xbf16>, vector<4x32xf32> -> vector<4x32xf32>
    %172 = arith.addf %167, %171 : vector<4x32xf32>
    %173 = math.tanh %172 : vector<4x32xf32>
    %cst_79 = arith.constant 1.000000e+00 : f32
    %174 = vector.broadcast %cst_79 : f32 to vector<4x32xf32>
    %175 = arith.subf %174, %166 : vector<4x32xf32>
    %176 = arith.mulf %175, %147 : vector<4x32xf32>
    %177 = arith.mulf %166, %173 : vector<4x32xf32>
    %178 = arith.addf %176, %177 : vector<4x32xf32>
    %c1_80 = arith.constant 1 : index
    %c0_81 = arith.constant 0 : index
    %c0_82 = arith.constant 0 : index
    %179 = vector.load %arg11[%c1_80, %c0_81, %c0_82] : memref<2x4x32xf32, #tpu.memory_space<vmem>>, vector<1x4x32xf32>
    %180 = vector.shape_cast %179 : vector<1x4x32xf32> to vector<4x32xf32>
    %181 = vector.shape_cast %178 : vector<4x32xf32> to vector<1x4x32xf32>
    tpu.vector_store %arg11[%c1_80, %c0_81, %c0_82], %181 {strides = array<i32>} : memref<2x4x32xf32, #tpu.memory_space<vmem>>, vector<1x4x32xf32>,
    %c0_83 = arith.constant 0 : index
    %c0_84 = arith.constant 0 : index
    %182 = vector.load %arg12[%c0_83, %c0_84] : memref<4x32xf32, #tpu.memory_space<vmem>>, vector<4x32xf32>
    tpu.vector_store %arg12[%c0_83, %c0_84], %178 {strides = array<i32>} : memref<4x32xf32, #tpu.memory_space<vmem>>, vector<4x32xf32>,
    return
  }
  func.func @transform_0(%arg0: i32) -> (i32, i32, i32) {
    %c0_i32 = arith.constant 0 : i32
    %c0_i32_0 = arith.constant 0 : i32
    %c0_i32_1 = arith.constant 0 : i32
    return %c0_i32, %arg0, %c0_i32_0 : i32, i32, i32
  }
  func.func @transform_1(%arg0: i32) -> (i32, i32) {
    %c0_i32 = arith.constant 0 : i32
    %c0_i32_0 = arith.constant 0 : i32
    %c0_i32_1 = arith.constant 0 : i32
    return %c0_i32, %c0_i32_0 : i32, i32
  }
  func.func @transform_2(%arg0: i32) -> (i32, i32) {
    %c0_i32 = arith.constant 0 : i32
    %c0_i32_0 = arith.constant 0 : i32
    %c0_i32_1 = arith.constant 0 : i32
    return %c0_i32, %c0_i32_0 : i32, i32
  }
  func.func @transform_3(%arg0: i32) -> (i32, i32) {
    %c0_i32 = arith.constant 0 : i32
    %c0_i32_0 = arith.constant 0 : i32
    %c0_i32_1 = arith.constant 0 : i32
    return %c0_i32, %c0_i32_0 : i32, i32
  }
  func.func @transform_4(%arg0: i32) -> (i32, i32) {
    %c0_i32 = arith.constant 0 : i32
    %c0_i32_0 = arith.constant 0 : i32
    %c0_i32_1 = arith.constant 0 : i32
    return %c0_i32, %c0_i32_0 : i32, i32
  }
  func.func @transform_5(%arg0: i32) -> (i32, i32) {
    %c0_i32 = arith.constant 0 : i32
    %c0_i32_0 = arith.constant 0 : i32
    %c0_i32_1 = arith.constant 0 : i32
    return %c0_i32, %c0_i32_0 : i32, i32
  }
  func.func @transform_6(%arg0: i32) -> (i32, i32) {
    %c0_i32 = arith.constant 0 : i32
    %c0_i32_0 = arith.constant 0 : i32
    %c0_i32_1 = arith.constant 0 : i32
    return %c0_i32, %c0_i32_0 : i32, i32
  }
  func.func @transform_7(%arg0: i32) -> (i32, i32) {
    %c0_i32 = arith.constant 0 : i32
    %c0_i32_0 = arith.constant 0 : i32
    %c0_i32_1 = arith.constant 0 : i32
    return %c0_i32, %c0_i32_0 : i32, i32
  }
  func.func @transform_8(%arg0: i32) -> (i32, i32) {
    %c0_i32 = arith.constant 0 : i32
    %c0_i32_0 = arith.constant 0 : i32
    %c0_i32_1 = arith.constant 0 : i32
    return %c0_i32, %c0_i32_0 : i32, i32
  }
  func.func @transform_9(%arg0: i32) -> (i32, i32) {
    %c0_i32 = arith.constant 0 : i32
    %c0_i32_0 = arith.constant 0 : i32
    %c0_i32_1 = arith.constant 0 : i32
    return %c0_i32, %c0_i32_0 : i32, i32
  }
  func.func @transform_10(%arg0: i32) -> (i32, i32, i32) {
    %c0_i32 = arith.constant 0 : i32
    %c0_i32_0 = arith.constant 0 : i32
    %c0_i32_1 = arith.constant 0 : i32
    return %arg0, %c0_i32, %c0_i32_0 : i32, i32, i32
  }
}

</mosaic_0001>

<llo_original>
// kernel: tpu_custom_call.1
$region0: #{tpu_custom_call.1}
  #allocation0 [shape = 'u32[]', space=smem, size = 0x4, offset = 0x4, fixed_abs, tag = 'smem constant byte address 0x4 - core index']
  #allocation1 [shape = 'u32[144,128]{1,0:T(1,128)}', space=vmem, size = 0x12000, scoped, tag = 'internal scratch']
  #allocation2 [shape = 'f32[4,32]{1,0:T(4,128)}', space=vmem, size = 0x800, scoped, tag = 'scratch operand']
  #allocation3 [shape = 'f32[4,8]{1,0:T(4,128)}', space=vmem, size = 0x800, scoped, tag = 'scratch operand']
  #allocation4 [shape = 'f32[4,8]{1,0:T(4,128)}', space=vmem, size = 0x800, scoped, tag = 'scratch operand']
  #allocation5 [shape = 'f32[4,8]{1,0:T(4,128)}', space=vmem, size = 0x800, scoped, tag = 'scratch operand']
  #allocation6 [shape = 'f32[8,8]{1,0:T(8,128)}', space=vmem, size = 0x1000, scoped, tag = 'scratch operand']
  %s0 = inlined_call_operand.vmem [shape: f32[3,32,8], index: 0, kind: input, shape index: {}]
  %s1 = inlined_call_operand.vmem [shape: f32[8,8], index: 1, kind: input, shape index: {}]
  %s2 = inlined_call_operand.vmem [shape: f32[1,8], index: 2, kind: input, shape index: {}]
  %s3 = inlined_call_operand.vmem [shape: f32[8,32], index: 3, kind: input, shape index: {}]
  %s4 = inlined_call_operand.vmem [shape: f32[1,32], index: 4, kind: input, shape index: {}]
  %s5 = inlined_call_operand.vmem [shape: bf16[8,96], index: 5, kind: input, shape index: {}]
  %s6 = inlined_call_operand.vmem [shape: bf16[8,96], index: 6, kind: input, shape index: {}]
  %s7 = inlined_call_operand.vmem [shape: f32[1,96], index: 7, kind: input, shape index: {}]
  %s8 = inlined_call_operand.vmem [shape: bf16[32,64], index: 8, kind: input, shape index: {}]
  %s9 = inlined_call_operand.vmem [shape: bf16[32,32], index: 9, kind: input, shape index: {}]
  %s10 = inlined_call_operand.hbm [shape: f32[8,4,32], index: 10, kind: output, shape index: {}]
  %s11 = sld [smem:[#allocation0]]
  $region115: #{tpu_custom_call.1} parent=0
    _
  %s13 = ssub.s32 1, %s11
  %s14 = scalar_select 0, %s13, %s11
  $region1: #{tpu_custom_call.1} parent=0
    #allocation7 [shape = 'u8[24576]{0}', space=vmem, size = 0x6000, scoped, tag = 'input window, operand 0']
    #allocation8 [shape = 'u8[8192]{0}', space=vmem, size = 0x2000, scoped, tag = 'output window, operand 0']
    #allocation9 [shape = 's32[2]{0}', space=sflag, size = 0x8, scoped, tag = 'scoped memory for tpu_custom_call.1']
    %15 = vsyncpa [#allocation9], 0
    %s16 = scalar_lea.sflag [#allocation9], 1
    %17 = vsyncpa %s16, 0
    loop: start=0, step=1, limit=6
    $region2: #{tpu_custom_call.1} parent=1 // loop_pre_header
      _
    $region3: #{tpu_custom_call.1} parent=1 // loop_header
      %s19 = sphi 0, %s23
      %p20 = scmp.ge.s32.totalorder %s19, 6
      %s29 = sphi 0, %s31
      %s32 = sphi 0, %s29
      %s33 = sphi 0, %s32
      %s49 = sphi 0, %s33
      %s53 = sphi 0, %s53
      %s55 = sphi 0, %s53
      %s56 = sphi 0, %s55
      %s70 = sphi 0, %s56
      %s74 = sphi 0, %s74
      %s76 = sphi 0, %s74
      %s77 = sphi 0, %s76
      %s91 = sphi 0, %s77
      %s95 = sphi 0, %s95
      %s97 = sphi 0, %s95
      %s98 = sphi 0, %s97
      %s112 = sphi 0, %s98
      %s116 = sphi 0, %s116
      %s118 = sphi 0, %s116
      %s119 = sphi 0, %s118
      %s133 = sphi 0, %s119
      %s137 = sphi 0, %s137
      %s139 = sphi 0, %s137
      %s140 = sphi 0, %s139
      %s154 = sphi 0, %s140
      %s158 = sphi 0, %s158
      %s160 = sphi 0, %s158
      %s161 = sphi 0, %s160
      %s175 = sphi 0, %s161
      %s179 = sphi 0, %s179
      %s181 = sphi 0, %s179
      %s182 = sphi 0, %s181
      %s196 = sphi 0, %s182
      %s200 = sphi 0, %s200
      %s202 = sphi 0, %s200
      %s203 = sphi 0, %s202
      %s217 = sphi 0, %s203
      %s221 = sphi 0, %s221
      %s223 = sphi 0, %s221
      %s224 = sphi 0, %s223
      %s238 = sphi 0, %s224
      %s244 = sphi 0, %s246
      %s247 = sphi 0, %s244
      %s248 = sphi 0, %s247
      %s264 = sphi 0, %s248
    $region4: #{tpu_custom_call.1} parent=1 // loop_header_branch
      %22 = sbr.rel (%p20) target = $region8
    $region5: #{tpu_custom_call.1} parent=1 // loop_body
      %s24 = ssub.s32 %s19, 1
      %s25 = ssub.s32 %s19, 2
      %s26 = sadd.s32 %s19, 1
      %s27 = ssub.s32 %s19, %s26
      %p28 = scmp.eq.s32.totalorder %s27, 0
      %s30 = sadd.s32 %s29, 1
      %s31 = scalar_select %p28, %s29, %s30
      %p34 = pneg %p28
      %p35 = scmp.eq.s32.totalorder %s19, 3
      %p36 = por %p34, %p35
      %p37 = scmp.ne.s32.totalorder %s29, %s32
      %p38 = scmp.eq.s32.totalorder %s19, 0
      %p39 = por %p37, %p38
      %p40 = scmp.ne.s32.totalorder %s29, %s32
      %p41 = scmp.eq.s32.totalorder %s24, 3
      %p42 = por %p40, %p41
      %p43 = scmp.ne.s32.totalorder %s32, %s33
      %p44 = scmp.eq.s32.totalorder %s24, 0
      %p45 = por %p43, %p44
      %p46 = scmp.ne.s32.totalorder %s32, %s33
      %p47 = scmp.eq.s32.totalorder %s25, 3
      %p48 = por %p46, %p47
      %p50 = scmp.ne.s32.totalorder %s33, %s49
      %p51 = scmp.eq.s32.totalorder %s25, 0
      %p52 = por %p50, %p51
      %s54 = sadd.s32 %s53, 1
      %p57 = scmp.eq.s32.totalorder %s19, 3
      %p58 = scmp.ne.s32.totalorder %s53, %s55
      %p59 = scmp.eq.s32.totalorder %s19, 0
      %p60 = por %p58, %p59
      %p61 = scmp.ne.s32.totalorder %s53, %s55
      %p62 = scmp.eq.s32.totalorder %s24, 3
      %p63 = por %p61, %p62
      %p64 = scmp.ne.s32.totalorder %s55, %s56
      %p65 = scmp.eq.s32.totalorder %s24, 0
      %p66 = por %p64, %p65
      %p67 = scmp.ne.s32.totalorder %s55, %s56
      %p68 = scmp.eq.s32.totalorder %s25, 3
      %p69 = por %p67, %p68
      %p71 = scmp.ne.s32.totalorder %s56, %s70
      %p72 = scmp.eq.s32.totalorder %s25, 0
      %p73 = por %p71, %p72
      %s75 = sadd.s32 %s74, 1
      %p78 = scmp.eq.s32.totalorder %s19, 3
      %p79 = scmp.ne.s32.totalorder %s74, %s76
      %p80 = scmp.eq.s32.totalorder %s19, 0
      %p81 = por %p79, %p80
      %p82 = scmp.ne.s32.totalorder %s74, %s76
      %p83 = scmp.eq.s32.totalorder %s24, 3
      %p84 = por %p82, %p83
      %p85 = scmp.ne.s32.totalorder %s76, %s77
      %p86 = scmp.eq.s32.totalorder %s24, 0
      %p87 = por %p85, %p86
      %p88 = scmp.ne.s32.totalorder %s76, %s77
      %p89 = scmp.eq.s32.totalorder %s25, 3
      %p90 = por %p88, %p89
      %p92 = scmp.ne.s32.totalorder %s77, %s91
      %p93 = scmp.eq.s32.totalorder %s25, 0
      %p94 = por %p92, %p93
      %s96 = sadd.s32 %s95, 1
      %p99 = scmp.eq.s32.totalorder %s19, 3
      %p100 = scmp.ne.s32.totalorder %s95, %s97
      %p101 = scmp.eq.s32.totalorder %s19, 0
      %p102 = por %p100, %p101
      %p103 = scmp.ne.s32.totalorder %s95, %s97
      %p104 = scmp.eq.s32.totalorder %s24, 3
      %p105 = por %p103, %p104
      %p106 = scmp.ne.s32.totalorder %s97, %s98
      %p107 = scmp.eq.s32.totalorder %s24, 0
      %p108 = por %p106, %p107
      %p109 = scmp.ne.s32.totalorder %s97, %s98
      %p110 = scmp.eq.s32.totalorder %s25, 3
      %p111 = por %p109, %p110
      %p113 = scmp.ne.s32.totalorder %s98, %s112
      %p114 = scmp.eq.s32.totalorder %s25, 0
      %p115 = por %p113, %p114
      %s117 = sadd.s32 %s116, 1
      %p120 = scmp.eq.s32.totalorder %s19, 3
      %p121 = scmp.ne.s32.totalorder %s116, %s118
      %p122 = scmp.eq.s32.totalorder %s19, 0
      %p123 = por %p121, %p122
      %p124 = scmp.ne.s32.totalorder %s116, %s118
      %p125 = scmp.eq.s32.totalorder %s24, 3
      %p126 = por %p124, %p125
      %p127 = scmp.ne.s32.totalorder %s118, %s119
      %p128 = scmp.eq.s32.totalorder %s24, 0
      %p129 = por %p127, %p128
      %p130 = scmp.ne.s32.totalorder %s118, %s119
      %p131 = scmp.eq.s32.totalorder %s25, 3
      %p132 = por %p130, %p131
      %p134 = scmp.ne.s32.totalorder %s119, %s133
      %p135 = scmp.eq.s32.totalorder %s25, 0
      %p136 = por %p134, %p135
      %s138 = sadd.s32 %s137, 1
      %p141 = scmp.eq.s32.totalorder %s19, 3
      %p142 = scmp.ne.s32.totalorder %s137, %s139
      %p143 = scmp.eq.s32.totalorder %s19, 0
      %p144 = por %p142, %p143
      %p145 = scmp.ne.s32.totalorder %s137, %s139
      %p146 = scmp.eq.s32.totalorder %s24, 3
      %p147 = por %p145, %p146
      %p148 = scmp.ne.s32.totalorder %s139, %s140
      %p149 = scmp.eq.s32.totalorder %s24, 0
      %p150 = por %p148, %p149
      %p151 = scmp.ne.s32.totalorder %s139, %s140
      %p152 = scmp.eq.s32.totalorder %s25, 3
      %p153 = por %p151, %p152
      %p155 = scmp.ne.s32.totalorder %s140, %s154
      %p156 = scmp.eq.s32.totalorder %s25, 0
      %p157 = por %p155, %p156
      %s159 = sadd.s32 %s158, 1
      %p162 = scmp.eq.s32.totalorder %s19, 3
      %p163 = scmp.ne.s32.totalorder %s158, %s160
      %p164 = scmp.eq.s32.totalorder %s19, 0
      %p165 = por %p163, %p164
      %p166 = scmp.ne.s32.totalorder %s158, %s160
      %p167 = scmp.eq.s32.totalorder %s24, 3
      %p168 = por %p166, %p167
      %p169 = scmp.ne.s32.totalorder %s160, %s161
      %p170 = scmp.eq.s32.totalorder %s24, 0
      %p171 = por %p169, %p170
      %p172 = scmp.ne.s32.totalorder %s160, %s161
      %p173 = scmp.eq.s32.totalorder %s25, 3
      %p174 = por %p172, %p173
      %p176 = scmp.ne.s32.totalorder %s161, %s175
      %p177 = scmp.eq.s32.totalorder %s25, 0
      %p178 = por %p176, %p177
      %s180 = sadd.s32 %s179, 1
      %p183 = scmp.eq.s32.totalorder %s19, 3
      %p184 = scmp.ne.s32.totalorder %s179, %s181
      %p185 = scmp.eq.s32.totalorder %s19, 0
      %p186 = por %p184, %p185
      %p187 = scmp.ne.s32.totalorder %s179, %s181
      %p188 = scmp.eq.s32.totalorder %s24, 3
      %p189 = por %p187, %p188
      %p190 = scmp.ne.s32.totalorder %s181, %s182
      %p191 = scmp.eq.s32.totalorder %s24, 0
      %p192 = por %p190, %p191
      %p193 = scmp.ne.s32.totalorder %s181, %s182
      %p194 = scmp.eq.s32.totalorder %s25, 3
      %p195 = por %p193, %p194
      %p197 = scmp.ne.s32.totalorder %s182, %s196
      %p198 = scmp.eq.s32.totalorder %s25, 0
      %p199 = por %p197, %p198
      %s201 = sadd.s32 %s200, 1
      %p204 = scmp.eq.s32.totalorder %s19, 3
      %p205 = scmp.ne.s32.totalorder %s200, %s202
      %p206 = scmp.eq.s32.totalorder %s19, 0
      %p207 = por %p205, %p206
      %p208 = scmp.ne.s32.totalorder %s200, %s202
      %p209 = scmp.eq.s32.totalorder %s24, 3
      %p210 = por %p208, %p209
      %p211 = scmp.ne.s32.totalorder %s202, %s203
      %p212 = scmp.eq.s32.totalorder %s24, 0
      %p213 = por %p211, %p212
      %p214 = scmp.ne.s32.totalorder %s202, %s203
      %p215 = scmp.eq.s32.totalorder %s25, 3
      %p216 = por %p214, %p215
      %p218 = scmp.ne.s32.totalorder %s203, %s217
      %p219 = scmp.eq.s32.totalorder %s25, 0
      %p220 = por %p218, %p219
      %s222 = sadd.s32 %s221, 1
      %p225 = scmp.eq.s32.totalorder %s19, 3
      %p226 = scmp.ne.s32.totalorder %s221, %s223
      %p227 = scmp.eq.s32.totalorder %s19, 0
      %p228 = por %p226, %p227
      %p229 = scmp.ne.s32.totalorder %s221, %s223
      %p230 = scmp.eq.s32.totalorder %s24, 3
      %p231 = por %p229, %p230
      %p232 = scmp.ne.s32.totalorder %s223, %s224
      %p233 = scmp.eq.s32.totalorder %s24, 0
      %p234 = por %p232, %p233
      %p235 = scmp.ne.s32.totalorder %s223, %s224
      %p236 = scmp.eq.s32.totalorder %s25, 3
      %p237 = por %p235, %p236
      %p239 = scmp.ne.s32.totalorder %s224, %s238
      %p240 = scmp.eq.s32.totalorder %s25, 0
      %p241 = por %p239, %p240
      %s242 = ssub.s32 %s19, %s26
      %p243 = scmp.eq.s32.totalorder %s242, 0
      %s245 = sadd.s32 %s244, 1
      %s246 = scalar_select %p243, %s244, %s245
      %p249 = pneg %p243
      %p250 = scmp.eq.s32.totalorder %s19, 3
      %p251 = por %p249, %p250
      %p252 = scmp.ne.s32.totalorder %s244, %s247
      %p253 = scmp.eq.s32.totalorder %s19, 0
      %p254 = por %p252, %p253
      %p255 = scmp.ne.s32.totalorder %s244, %s247
      %p256 = scmp.eq.s32.totalorder %s24, 3
      %p257 = por %p255, %p256
      %p258 = scmp.ne.s32.totalorder %s247, %s248
      %p259 = scmp.eq.s32.totalorder %s24, 0
      %p260 = por %p258, %p259
      %p261 = scmp.ne.s32.totalorder %s247, %s248
      %p262 = scmp.eq.s32.totalorder %s25, 3
      %p263 = por %p261, %p262
      %p265 = scmp.ne.s32.totalorder %s248, %s264
      %p266 = scmp.eq.s32.totalorder %s25, 0
      %p267 = por %p265, %p266
      %p268 = scmp.le.s32.totalorder 1, %s19
      %p269 = scmp.lt.s32.totalorder %s19, 5
      %p270 = pnand %p268, %p269
      %p271 = pneg %p270
      // Predicated region
      $region9: #{tpu_custom_call.1} parent=5 // pred_check
        _
      $region10: #{tpu_custom_call.1} parent=5 // pred_check_branch
        %273 = sbr.rel (%p270) target = $region12
      $region11: #{tpu_custom_call.1} parent=5 // pred_region
        %s274 = ssub.s32 %s19, 1
        // Predicated region
        $region13: #{tpu_custom_call.1} parent=11 // pred_check
          %p275 = pneg %p66
        $region14: #{tpu_custom_call.1} parent=11 // pred_check_branch
          %277 = sbr.rel (%p275) target = $region16
        $region15: #{tpu_custom_call.1} parent=11 // pred_region
          _
        $region16: #{tpu_custom_call.1} parent=11 // pred_fallthru
          _
        // Predicated region
        $region17: #{tpu_custom_call.1} parent=11 // pred_check
          %p278 = pneg %p87
        $region18: #{tpu_custom_call.1} parent=11 // pred_check_branch
          %280 = sbr.rel (%p278) target = $region20
        $region19: #{tpu_custom_call.1} parent=11 // pred_region
          _
        $region20: #{tpu_custom_call.1} parent=11 // pred_fallthru
          _
        // Predicated region
        $region21: #{tpu_custom_call.1} parent=11 // pred_check
          %p281 = pneg %p108
        $region22: #{tpu_custom_call.1} parent=11 // pred_check_branch
          %283 = sbr.rel (%p281) target = $region24
        $region23: #{tpu_custom_call.1} parent=11 // pred_region
          _
        $region24: #{tpu_custom_call.1} parent=11 // pred_fallthru
          _
        // Predicated region
        $region25: #{tpu_custom_call.1} parent=11 // pred_check
          %p284 = pneg %p129
        $region26: #{tpu_custom_call.1} parent=11 // pred_check_branch
          %286 = sbr.rel (%p284) target = $region28
        $region27: #{tpu_custom_call.1} parent=11 // pred_region
          _
        $region28: #{tpu_custom_call.1} parent=11 // pred_fallthru
          _
        // Predicated region
        $region29: #{tpu_custom_call.1} parent=11 // pred_check
          %p287 = pneg %p150
        $region30: #{tpu_custom_call.1} parent=11 // pred_check_branch
          %289 = sbr.rel (%p287) target = $region32
        $region31: #{tpu_custom_call.1} parent=11 // pred_region
          _
        $region32: #{tpu_custom_call.1} parent=11 // pred_fallthru
          _
        // Predicated region
        $region33: #{tpu_custom_call.1} parent=11 // pred_check
          %p290 = pneg %p171
        $region34: #{tpu_custom_call.1} parent=11 // pred_check_branch
          %292 = sbr.rel (%p290) target = $region36
        $region35: #{tpu_custom_call.1} parent=11 // pred_region
          _
        $region36: #{tpu_custom_call.1} parent=11 // pred_fallthru
          _
        // Predicated region
        $region37: #{tpu_custom_call.1} parent=11 // pred_check
          %p293 = pneg %p192
        $region38: #{tpu_custom_call.1} parent=11 // pred_check_branch
          %295 = sbr.rel (%p293) target = $region40
        $region39: #{tpu_custom_call.1} parent=11 // pred_region
          _
        $region40: #{tpu_custom_call.1} parent=11 // pred_fallthru
          _
        // Predicated region
        $region41: #{tpu_custom_call.1} parent=11 // pred_check
          %p296 = pneg %p213
        $region42: #{tpu_custom_call.1} parent=11 // pred_check_branch
          %298 = sbr.rel (%p296) target = $region44
        $region43: #{tpu_custom_call.1} parent=11 // pred_region
          _
        $region44: #{tpu_custom_call.1} parent=11 // pred_fallthru
          _
        // Predicated region
        $region45: #{tpu_custom_call.1} parent=11 // pred_check
          %p299 = pneg %p234
        $region46: #{tpu_custom_call.1} parent=11 // pred_check_branch
          %301 = sbr.rel (%p299) target = $region48
        $region47: #{tpu_custom_call.1} parent=11 // pred_region
          _
        $region48: #{tpu_custom_call.1} parent=11 // pred_fallthru
          _
      $region12: #{tpu_custom_call.1} parent=5 // pred_fallthru
        _
      %p302 = scmp.lt.s32.totalorder %s19, 4
      // Predicated region
      $region49: #{tpu_custom_call.1} parent=5 // pred_check
        %p303 = pneg %p302
      $region50: #{tpu_custom_call.1} parent=5 // pred_check_branch
        %305 = sbr.rel (%p303) target = $region52
      $region51: #{tpu_custom_call.1} parent=5 // pred_region
        // Predicated region
        $region53: #{tpu_custom_call.1} parent=51 // pred_check
          %p306 = pneg %p39
        $region54: #{tpu_custom_call.1} parent=51 // pred_check_branch
          %308 = sbr.rel (%p306) target = $region56
        $region55: #{tpu_custom_call.1} parent=51 // pred_region
          %s309 = sand.u32 %s29, 1
          %s310 = sand.u32 %s29, 1
          %s311 = smul.addr %s310, 24
          %s312 = scalar_lea.vmem [#allocation7], %s311
          %s313 = smul.addr %s19, 8
          %s314 = scalar_lea.vmem %s0, %s313
          // Predicated region
          $region57: #{tpu_custom_call.1} parent=55 // pred_check
            _
          $region58: #{tpu_custom_call.1} parent=55 // pred_check_branch
            %316 = sbr.rel (0) target = $region60
          $region59: #{tpu_custom_call.1} parent=55 // pred_region
            // Predicated region
            $region61: #{tpu_custom_call.1} parent=59 // pred_check
              _
            $region62: #{tpu_custom_call.1} parent=59 // pred_check_branch
              %318 = sbr.rel (0) target = $region64
            $region63: #{tpu_custom_call.1} parent=59 // pred_region
              // Predicated region
              $region76: #{tpu_custom_call.1} parent=63 // pred_check
                _
              $region77: #{tpu_custom_call.1} parent=63 // pred_check_branch
                %337 = sbr.rel (0) target = $region79
              $region78: #{tpu_custom_call.1} parent=63 // pred_region
                loop: start=0, step=1, limit=1
                $region80: #{tpu_custom_call.1} parent=78 // loop_pre_header
                  _
                $region81: #{tpu_custom_call.1} parent=78 // loop_header
                  %s339 = sphi 0, %s343
                  %p340 = scmp.ge.s32.totalorder %s339, 1
                  %s344 = sphi %s314, %s314
                  %s345 = sphi %s312, %s312
                $region82: #{tpu_custom_call.1} parent=78 // loop_header_branch
                  %342 = sbr.rel (%p340) target = $region86
                $region83: #{tpu_custom_call.1} parent=78 // loop_body
                  %v346 = vld [vmem:[%s344] sm:$0xff]
                  %347 = vst [vmem:[%s345] sm:$0xff] %v346
                  %v348 = vld [vmem:[%s344 + $0x20] sm:$0xff]
                  %349 = vst [vmem:[%s345 + $0x8] sm:$0xff] %v348
                  %v350 = vld [vmem:[%s344 + $0x40] sm:$0xff]
                  %351 = vst [vmem:[%s345 + $0x10] sm:$0xff] %v350
                $region84: #{tpu_custom_call.1} parent=78 // loop_footer
                  %s343 = sadd.s32 1, %s339
                $region85: #{tpu_custom_call.1} parent=78 // loop_footer_branch
                  %338 = sbr.rel target = $region81
                $region86: #{tpu_custom_call.1} parent=78 // loop_exit
                  _
              $region79: #{tpu_custom_call.1} parent=63 // pred_fallthru
                _
              // Predicated region
              $region87: #{tpu_custom_call.1} parent=63 // pred_check
                _
              $region88: #{tpu_custom_call.1} parent=63 // pred_check_branch
                %353 = sbr.rel target = $region90
              $region89: #{tpu_custom_call.1} parent=63 // pred_region
                _
              $region90: #{tpu_custom_call.1} parent=63 // pred_fallthru
                _
            $region64: #{tpu_custom_call.1} parent=59 // pred_fallthru
              _
            // Predicated region
            $region65: #{tpu_custom_call.1} parent=59 // pred_check
              _
            $region66: #{tpu_custom_call.1} parent=59 // pred_check_branch
              %320 = sbr.rel target = $region68
            $region67: #{tpu_custom_call.1} parent=59 // pred_region
              loop: start=0, step=1, limit=1
              $region69: #{tpu_custom_call.1} parent=67 // loop_pre_header
                _
              $region70: #{tpu_custom_call.1} parent=67 // loop_header
                %s323 = sphi 0, %s327
                %p324 = scmp.ge.s32.totalorder %s323, 1
                %s328 = sphi %s314, %s314
                %s329 = sphi %s312, %s312
              $region71: #{tpu_custom_call.1} parent=67 // loop_header_branch
                %326 = sbr.rel (%p324) target = $region75
              $region72: #{tpu_custom_call.1} parent=67 // loop_body
                %v330 = vld [vmem:[%s328] sm:$0xff]
                %331 = vst [vmem:[%s329] sm:$0xff] %v330
                %v332 = vld [vmem:[%s328 + $0x20] sm:$0xff]
                %333 = vst [vmem:[%s329 + $0x8] sm:$0xff] %v332
                %v334 = vld [vmem:[%s328 + $0x40] sm:$0xff]
                %335 = vst [vmem:[%s329 + $0x10] sm:$0xff] %v334
              $region73: #{tpu_custom_call.1} parent=67 // loop_footer
                %s327 = sadd.s32 1, %s323
              $region74: #{tpu_custom_call.1} parent=67 // loop_footer_branch
                %322 = sbr.rel target = $region70
              $region75: #{tpu_custom_call.1} parent=67 // loop_exit
                _
            $region68: #{tpu_custom_call.1} parent=59 // pred_fallthru
              _
          $region60: #{tpu_custom_call.1} parent=55 // pred_fallthru
            _
          %354 = vnop
        $region56: #{tpu_custom_call.1} parent=51 // pred_fallthru
          _
      $region52: #{tpu_custom_call.1} parent=5 // pred_fallthru
        _
      %p355 = scmp.le.s32.totalorder 1, %s19
      %p356 = scmp.lt.s32.totalorder %s19, 5
      %p357 = pnand %p355, %p356
      %p358 = pneg %p357
      // Predicated region
      $region91: #{tpu_custom_call.1} parent=5 // pred_check
        _
      $region92: #{tpu_custom_call.1} parent=5 // pred_check_branch
        %360 = sbr.rel (%p357) target = $region94
      $region93: #{tpu_custom_call.1} parent=5 // pred_region
        %s361 = ssub.s32 %s19, 1
        %s362 = sand.u32 %s32, 1
        %s363 = sand.u32 %s32, 1
        %s364 = smul.addr %s363, 24
        %s365 = scalar_lea.vmem [#allocation7], %s364
        // Predicated region
        $region95: #{tpu_custom_call.1} parent=93 // pred_check
          %p366 = pneg %p45
        $region96: #{tpu_custom_call.1} parent=93 // pred_check_branch
          %368 = sbr.rel (%p366) target = $region98
        $region97: #{tpu_custom_call.1} parent=93 // pred_region
          _
        $region98: #{tpu_custom_call.1} parent=93 // pred_fallthru
          _
        %s369 = sand.u32 %s32, 1
        %s370 = sand.u32 %s32, 1
        %s371 = smul.addr %s370, 24
        %s372 = scalar_lea.vmem [#allocation7], %s371
        %p373 = pneg %p45
        %p374 = pneg %p42
        %p375 = pneg %p66
        %p376 = pneg %p63
        %p377 = pneg %p87
        %p378 = pneg %p84
        %p379 = pneg %p108
        %p380 = pneg %p105
        %p381 = pneg %p129
        %p382 = pneg %p126
        %p383 = pneg %p150
        %p384 = pneg %p147
        %p385 = pneg %p171
        %p386 = pneg %p168
        %p387 = pneg %p192
        %p388 = pneg %p189
        %p389 = pneg %p213
        %p390 = pneg %p210
        %p391 = pneg %p234
        %p392 = pneg %p231
        %p393 = pneg %p260
        %p394 = pneg %p257
        %s395 = sand.u32 %s247, 1
        %s396 = scalar_lea.sflag [#allocation9], %s395
        %s397 = sand.u32 %s247, 1
        %s398 = smul.addr %s397, 8
        %s399 = scalar_lea.vmem [#allocation8], %s398
        %s400 = smul.u32 2, %s24
        %p402 = scmp.eq.s32.totalorder %s24, 0
        // Predicated region
        $region99: #{tpu_custom_call.1} parent=93 // pred_check
          %p403 = pneg %p402
        $region100: #{tpu_custom_call.1} parent=93 // pred_check_branch
          %405 = sbr.rel (%p403) target = $region102
        $region101: #{tpu_custom_call.1} parent=93 // pred_region
          %vm406 = vcmask 257024
          %407 = vst.msk [vmem:[#allocation2] sm:$0xf] %vm406, 0.0
          %vm408 = vcmask 60416
          %409 = vst.msk [vmem:[#allocation3] sm:$0xf] %vm408, 0.0
          %410 = vst.msk [vmem:[#allocation4] sm:$0xf] %vm408, 0.0
          %411 = vst.msk [vmem:[#allocation5] sm:$0xf] %vm408, 0.0
        $region102: #{tpu_custom_call.1} parent=93 // pred_fallthru
          _
        %v412 = vld [vmem:[%s365] sm:$0xff]
        %s413 = scalar_lea.vmem %s365, 8 [#allocation7]
        %v414 = vld [vmem:[%s413] sm:$0xff]
        %s415 = scalar_lea.vmem %s365, 16 [#allocation7]
        %v416 = vld [vmem:[%s415] sm:$0xff]
        %v417 = vld [vmem:[%s1] sm:$0xff]
        %v418 = vld [vmem:[%s2] sm:$0x1]
        %v420 = vlaneseq
        %v421 = vshrl.u32 %v420, 7
        %v422 = vsub.s32 0, %v421
        %v423 = vrot.slane %v418, %v422
        %vm425 = vcmask 64512
        %v427 = vsel %vm425, %v416, 0
        %429 = vmatprep.subr.mxu0 0.0
        %430 = vmatpush1.msra.mxu0 %v417
        %431 = vmatprep.subr.mxu0 0.0
        %432 = vmatpush1.msra.mxu0 0.0
        %433 = vmatprep.subr.mxu0 0.0
        %434 = vmatpush1.msra.mxu0 0.0
        %435 = vmatprep.subr.mxu0 0.0
        %436 = vmatpush1.msra.mxu0 0.0
        %437 = vmatprep.subr.mxu0 0.0
        %438 = vmatpush1.msra.mxu0 0.0
        %439 = vmatprep.subr.mxu0 0.0
        %440 = vmatpush1.msra.mxu0 0.0
        %441 = vmatprep.subr.mxu0 0.0
        %442 = vmatpush1.msra.mxu0 0.0
        %443 = vmatprep.subr.mxu0 0.0
        %444 = vmatpush1.msra.mxu0 0.0
        %445 = vmatprep.subr.mxu0 0.0
        %446 = vmatpush1.msra.mxu0 0.0
        %447 = vmatprep.subr.mxu0 0.0
        %448 = vmatpush1.msra.mxu0 0.0
        %449 = vmatprep.subr.mxu0 0.0
        %450 = vmatpush1.msra.mxu0 0.0
        %451 = vmatprep.subr.mxu0 0.0
        %452 = vmatpush1.msra.mxu0 0.0
        %453 = vmatprep.subr.mxu0 0.0
        %454 = vmatpush1.msra.mxu0 0.0
        %455 = vmatprep.subr.mxu0 0.0
        %456 = vmatpush1.msra.mxu0 0.0
        %457 = vmatprep.subr.mxu0 0.0
        %458 = vmatpush1.msra.mxu0 0.0
        %459 = vmatprep.subr.mxu0 0.0
        %460 = vmatpush1.msra.mxu0 0.0
        %461 = vmatprep.subr.mxu0 0.0
        %462 = vmatpush1.msra.mxu0 0.0
        %463 = vmatprep.subr.mxu0 0.0
        %464 = vmatpush1.msra.mxu0 0.0
        %465 = vmatprep.subr.mxu0 0.0
        %466 = vmatpush1.msra.mxu0 0.0
        %467 = vmatprep.subr.mxu0 0.0
        %468 = vmatpush1.msra.mxu0 0.0
        %469 = vmatprep.subr.mxu0 0.0
        %470 = vmatpush1.msra.mxu0 0.0
        %471 = vmatprep.subr.mxu0 0.0
        %472 = vmatpush1.msra.mxu0 0.0
        %473 = vmatprep.subr.mxu0 0.0
        %474 = vmatpush1.msra.mxu0 0.0
        %475 = vmatprep.subr.mxu0 0.0
        %476 = vmatpush1.msra.mxu0 0.0
        %477 = vmatprep.subr.mxu0 0.0
        %478 = vmatpush1.msra.mxu0 0.0
        %479 = vmatprep.subr.mxu0 0.0
        %480 = vmatpush1.msra.mxu0 0.0
        %481 = vmatprep.subr.mxu0 0.0
        %482 = vmatpush1.msra.mxu0 0.0
        %483 = vmatprep.subr.mxu0 0.0
        %484 = vmatpush1.msra.mxu0 0.0
        %485 = vmatprep.subr.mxu0 0.0
        %486 = vmatpush1.msra.mxu0 0.0
        %487 = vmatprep.subr.mxu0 0.0
        %488 = vmatpush1.msra.mxu0 0.0
        %489 = vmatprep.subr.mxu0 0.0
        %490 = vmatpush1.msra.mxu0 0.0
        %491 = vmatprep.subr.mxu0 0.0
        %492 = vmatpush1.msra.mxu0 0.0
        %493 = vmatprep.mubr.f32.mxu0 0.0
        %494 = vmatmul.mubr.f32.gmra.mrb[0].mxu0 %v427
        %v495 = vpop.f32.mrb[0].mxu0
        %v496 = vadd.f32 %v423, %v495
        %v497 = vpop.f32.mrb[0].mxu0
        %498 = vdwg.mxu0
        %v499 = vmax.f32 %v496, 0.0
        %v500 = vsub.f32 0.0, %v499
        %v501 = vmul.f32 %v500, 1.442695
        %v502 = vpow.pop %v501
        %v503 = vld [vmem:[%s3] sm:$0xff]
        %v504 = vld [vmem:[%s4] sm:$0x1]
        %v506 = vlaneseq
        %v507 = vshrl.u32 %v506, 7
        %v508 = vsub.s32 0, %v507
        %v509 = vrot.slane %v504, %v508
        %511 = vmatprep.subr.mxu0 0.0
        %512 = vmatpush1.msra.mxu0 %v503
        %513 = vmatprep.subr.mxu0 0.0
        %514 = vmatpush1.msra.mxu0 0.0
        %515 = vmatprep.subr.mxu0 0.0
        %516 = vmatpush1.msra.mxu0 0.0
        %517 = vmatprep.subr.mxu0 0.0
        %518 = vmatpush1.msra.mxu0 0.0
        %519 = vmatprep.subr.mxu0 0.0
        %520 = vmatpush1.msra.mxu0 0.0
        %521 = vmatprep.subr.mxu0 0.0
        %522 = vmatpush1.msra.mxu0 0.0
        %523 = vmatprep.subr.mxu0 0.0
        %524 = vmatpush1.msra.mxu0 0.0
        %525 = vmatprep.subr.mxu0 0.0
        %526 = vmatpush1.msra.mxu0 0.0
        %527 = vmatprep.subr.mxu0 0.0
        %528 = vmatpush1.msra.mxu0 0.0
        %529 = vmatprep.subr.mxu0 0.0
        %530 = vmatpush1.msra.mxu0 0.0
        %531 = vmatprep.subr.mxu0 0.0
        %532 = vmatpush1.msra.mxu0 0.0
        %533 = vmatprep.subr.mxu0 0.0
        %534 = vmatpush1.msra.mxu0 0.0
        %535 = vmatprep.subr.mxu0 0.0
        %536 = vmatpush1.msra.mxu0 0.0
        %537 = vmatprep.subr.mxu0 0.0
        %538 = vmatpush1.msra.mxu0 0.0
        %539 = vmatprep.subr.mxu0 0.0
        %540 = vmatpush1.msra.mxu0 0.0
        %541 = vmatprep.subr.mxu0 0.0
        %542 = vmatpush1.msra.mxu0 0.0
        %543 = vmatprep.subr.mxu0 0.0
        %544 = vmatpush1.msra.mxu0 0.0
        %545 = vmatprep.subr.mxu0 0.0
        %546 = vmatpush1.msra.mxu0 0.0
        %547 = vmatprep.subr.mxu0 0.0
        %548 = vmatpush1.msra.mxu0 0.0
        %549 = vmatprep.subr.mxu0 0.0
        %550 = vmatpush1.msra.mxu0 0.0
        %551 = vmatprep.subr.mxu0 0.0
        %552 = vmatpush1.msra.mxu0 0.0
        %553 = vmatprep.subr.mxu0 0.0
        %554 = vmatpush1.msra.mxu0 0.0
        %555 = vmatprep.subr.mxu0 0.0
        %556 = vmatpush1.msra.mxu0 0.0
        %557 = vmatprep.subr.mxu0 0.0
        %558 = vmatpush1.msra.mxu0 0.0
        %559 = vmatprep.subr.mxu0 0.0
        %560 = vmatpush1.msra.mxu0 0.0
        %561 = vmatprep.subr.mxu0 0.0
        %562 = vmatpush1.msra.mxu0 0.0
        %563 = vmatprep.subr.mxu0 0.0
        %564 = vmatpush1.msra.mxu0 0.0
        %565 = vmatprep.subr.mxu0 0.0
        %566 = vmatpush1.msra.mxu0 0.0
        %567 = vmatprep.subr.mxu0 0.0
        %568 = vmatpush1.msra.mxu0 0.0
        %569 = vmatprep.subr.mxu0 0.0
        %570 = vmatpush1.msra.mxu0 0.0
        %571 = vmatprep.subr.mxu0 0.0
        %572 = vmatpush1.msra.mxu0 0.0
        %573 = vmatprep.subr.mxu0 0.0
        %574 = vmatpush1.msra.mxu0 0.0
        %575 = vmatprep.mubr.f32.mxu0 0.0
        %576 = vmatmul.mubr.f32.gmra.mrb[0].mxu0 %v427
        %v577 = vpop.f32.mrb[0].mxu0
        %v578 = vadd.f32 %v509, %v577
        %v579 = vpop.f32.mrb[0].mxu0
        %580 = vdwg.mxu0
        %v581 = vmax.f32 %v578, 0.0
        %v582 = vsub.f32 0.0, %v581
        %v583 = vmul.f32 %v582, 1.442695
        %v584 = vpow.pop %v583
        %v585 = vpack.c.bf16 %v414, %v414
        %v586 = vld [vmem:[%s6] sm:$0xf]
        %v588 = vsel %vm425, %v585, 0
        %vm590 = vcmask 1043456
        %v592 = vsel %vm590, %v586, 0
        %594 = vmatprep.subr.bf16.mxu0 0
        %595 = vmatpush1.bf16.msra.mxu0 %v592
        %596 = vmatprep.subr.bf16.mxu0 0
        %597 = vmatpush1.bf16.msra.mxu0 0
        %598 = vmatprep.subr.bf16.mxu0 0
        %599 = vmatpush1.bf16.msra.mxu0 0
        %600 = vmatprep.subr.bf16.mxu0 0
        %601 = vmatpush1.bf16.msra.mxu0 0
        %602 = vmatprep.subr.bf16.mxu0 0
        %603 = vmatpush1.bf16.msra.mxu0 0
        %604 = vmatprep.subr.bf16.mxu0 0
        %605 = vmatpush1.bf16.msra.mxu0 0
        %606 = vmatprep.subr.bf16.mxu0 0
        %607 = vmatpush1.bf16.msra.mxu0 0
        %608 = vmatprep.subr.bf16.mxu0 0
        %609 = vmatpush1.bf16.msra.mxu0 0
        %610 = vmatprep.subr.bf16.mxu0 0
        %611 = vmatpush1.bf16.msra.mxu0 0
        %612 = vmatprep.subr.bf16.mxu0 0
        %613 = vmatpush1.bf16.msra.mxu0 0
        %614 = vmatprep.subr.bf16.mxu0 0
        %615 = vmatpush1.bf16.msra.mxu0 0
        %616 = vmatprep.subr.bf16.mxu0 0
        %617 = vmatpush1.bf16.msra.mxu0 0
        %618 = vmatprep.subr.bf16.mxu0 0
        %619 = vmatpush1.bf16.msra.mxu0 0
        %620 = vmatprep.subr.bf16.mxu0 0
        %621 = vmatpush1.bf16.msra.mxu0 0
        %622 = vmatprep.subr.bf16.mxu0 0
        %623 = vmatpush1.bf16.msra.mxu0 0
        %624 = vmatprep.subr.bf16.mxu0 0
        %625 = vmatpush1.bf16.msra.mxu0 0
        %626 = vmatprep.mubr.bf16.mxu0 0
        %627 = vmatmul.mubr.bf16.gmra.mrb[0].mxu0 %v588
        %v628 = vpop.f32.mrb[0].mxu0
        %v629 = vadd.f32 0.0, %v628
        %v630 = vpop.f32.mrb[0].mxu0
        %v631 = vpop.f32.mrb[0].mxu0
        %v632 = vpop.f32.mrb[0].mxu0
        %633 = vdwg.mxu0
        %v634 = vld [vmem:[#allocation3] sm:$0xf]
        %v635 = vld [vmem:[#allocation4] sm:$0xf]
        %v636 = vld [vmem:[#allocation5] sm:$0xf]
        %v637 = vmul.f32 %v414, %v412
        %v638 = vadd.f32 %v635, %v637
        %v639 = vadd.f32 %v636, %v414
        %vm640 = vcmp.gt.f32.partialorder %v639, 0.0
        %v641 = vsel %vm640, %v639, 1.0
        %v642 = vrcp.pop %v641
        %v643 = vmul.f32 %v638, %v642
        %v644 = vsel %vm640, %v643, 0.0
        %v645 = vsub.f32 1.0, %v414
        %v646 = vmul.f32 %v645, %v634
        %v647 = vadd.f32 %v637, %v646
        %v648 = vmul.f32 %v502, %v647
        %v649 = vsub.f32 1.0, %v502
        %v650 = vmul.f32 %v649, %v644
        %v651 = vadd.f32 %v648, %v650
        %v652 = vmul.f32 %v645, %v651
        %v653 = vadd.f32 %v637, %v652
        %vm654 = vcmask 60416
        %655 = vst.msk [vmem:[#allocation6] sm:$0xf] %vm654, %v653
        %v657 = vrot.slane %v637, 4
        %v659 = vadd.f32 %v638, %v657
        %v661 = vrot.slane %v414, 4
        %v663 = vadd.f32 %v639, %v661
        %vm664 = vcmp.gt.f32.partialorder %v663, 0.0
        %v665 = vsel %vm664, %v663, 1.0
        %v666 = vrcp.pop %v665
        %v667 = vmul.f32 %v659, %v666
        %v668 = vsel %vm664, %v667, 0.0
        %v670 = vrot.slane %v647, 4
        %v672 = vmul.f32 %v645, %v670
        %v673 = vadd.f32 %v637, %v672
        %v674 = vmul.f32 %v502, %v673
        %v676 = vrot.slane %v668, 4
        %v678 = vmul.f32 %v649, %v676
        %v679 = vadd.f32 %v674, %v678
        %v680 = vmul.f32 %v645, %v679
        %v681 = vadd.f32 %v637, %v680
        %vm682 = vcmask 64516
        %683 = vst.msk [vmem:[#allocation6] sm:$0xf0] %vm682, %v681
        %684 = vst.msk [vmem:[#allocation3 - $0x4] sm:$0xf0] %vm682, %v673
        %685 = vst.msk [vmem:[#allocation4] sm:$0xf] %vm654, %v659
        %686 = vst.msk [vmem:[#allocation5] sm:$0xf] %vm654, %v663
        %v687 = vld [vmem:[#allocation6] sm:$0xff]
        %v688 = vpack.c.bf16 %v687, %v687
        %v689 = vld [vmem:[%s5] sm:$0xf]
        %v691 = vsel %vm425, %v688, 0
        %v694 = vsel %vm590, %v689, 0
        %696 = vmatprep.subr.bf16.mxu0 0
        %697 = vmatpush1.bf16.msra.mxu0 %v694
        %698 = vmatprep.subr.bf16.mxu0 0
        %699 = vmatpush1.bf16.msra.mxu0 0
        %700 = vmatprep.subr.bf16.mxu0 0
        %701 = vmatpush1.bf16.msra.mxu0 0
        %702 = vmatprep.subr.bf16.mxu0 0
        %703 = vmatpush1.bf16.msra.mxu0 0
        %704 = vmatprep.subr.bf16.mxu0 0
        %705 = vmatpush1.bf16.msra.mxu0 0
        %706 = vmatprep.subr.bf16.mxu0 0
        %707 = vmatpush1.bf16.msra.mxu0 0
        %708 = vmatprep.subr.bf16.mxu0 0
        %709 = vmatpush1.bf16.msra.mxu0 0
        %710 = vmatprep.subr.bf16.mxu0 0
        %711 = vmatpush1.bf16.msra.mxu0 0
        %712 = vmatprep.subr.bf16.mxu0 0
        %713 = vmatpush1.bf16.msra.mxu0 0
        %714 = vmatprep.subr.bf16.mxu0 0
        %715 = vmatpush1.bf16.msra.mxu0 0
        %716 = vmatprep.subr.bf16.mxu0 0
        %717 = vmatpush1.bf16.msra.mxu0 0
        %718 = vmatprep.subr.bf16.mxu0 0
        %719 = vmatpush1.bf16.msra.mxu0 0
        %720 = vmatprep.subr.bf16.mxu0 0
        %721 = vmatpush1.bf16.msra.mxu0 0
        %722 = vmatprep.subr.bf16.mxu0 0
        %723 = vmatpush1.bf16.msra.mxu0 0
        %724 = vmatprep.subr.bf16.mxu0 0
        %725 = vmatpush1.bf16.msra.mxu0 0
        %726 = vmatprep.subr.bf16.mxu0 0
        %727 = vmatpush1.bf16.msra.mxu0 0
        %728 = vmatprep.mubr.bf16.mxu0 0
        %729 = vmatmul.mubr.bf16.gmra.mrb[0].mxu0 %v691
        %v730 = vpop.f32.mrb[0].mxu0
        %v731 = vadd.f32 %v629, %v730
        %v732 = vpop.f32.mrb[0].mxu0
        %v733 = vpop.f32.mrb[0].mxu0
        %v734 = vpop.f32.mrb[0].mxu0
        %735 = vdwg.mxu0
        %v736 = vld [vmem:[%s7] sm:$0x1]
        %v738 = vlaneseq
        %v739 = vshrl.u32 %v738, 7
        %v740 = vsub.s32 0, %v739
        %v741 = vrot.slane %v736, %v740
        %v743 = vadd.f32 %v731, %v741
        %v744 = vld [vmem:[#allocation2] sm:$0xf]
        %v745 = vmul.f32 %v584, %v744
        %v746 = vpack.c.bf16 %v745, %v745
        %v747 = vld [vmem:[%s8] sm:$0xf]
        %v748 = vld [vmem:[%s8 + $0x4] sm:$0xf]
        %v749 = vld [vmem:[%s8 + $0x8] sm:$0xf]
        %v750 = vld [vmem:[%s8 + $0xc] sm:$0xf]
        %v755 = vunpack.c.l.b16 %v747
        %v756 = vunpack.c.l.b16 %v748
        %v757 = vunpack.c.l.b16 %v749
        %v758 = vunpack.c.l.b16 %v750
        %v759 = vpack.c.b16 %v756, %v755
        %v760 = vpack.c.b16 %v758, %v757
        %vm763 = vcmask 261120
        %v765 = vsel %vm763, %v746, 0
        %767 = vmatprep.subr.bf16.mxu0 0
        %768 = vmatpush1.bf16.msra.mxu0 %v759
        %769 = vmatprep.subr.bf16.mxu0 0
        %770 = vmatpush1.bf16.msra.mxu0 %v760
        %771 = vmatprep.subr.bf16.mxu0 0
        %772 = vmatpush1.bf16.msra.mxu0 0
        %773 = vmatprep.subr.bf16.mxu0 0
        %774 = vmatpush1.bf16.msra.mxu0 0
        %775 = vmatprep.subr.bf16.mxu0 0
        %776 = vmatpush1.bf16.msra.mxu0 0
        %777 = vmatprep.subr.bf16.mxu0 0
        %778 = vmatpush1.bf16.msra.mxu0 0
        %779 = vmatprep.subr.bf16.mxu0 0
        %780 = vmatpush1.bf16.msra.mxu0 0
        %781 = vmatprep.subr.bf16.mxu0 0
        %782 = vmatpush1.bf16.msra.mxu0 0
        %783 = vmatprep.subr.bf16.mxu0 0
        %784 = vmatpush1.bf16.msra.mxu0 0
        %785 = vmatprep.subr.bf16.mxu0 0
        %786 = vmatpush1.bf16.msra.mxu0 0
        %787 = vmatprep.subr.bf16.mxu0 0
        %788 = vmatpush1.bf16.msra.mxu0 0
        %789 = vmatprep.subr.bf16.mxu0 0
        %790 = vmatpush1.bf16.msra.mxu0 0
        %791 = vmatprep.subr.bf16.mxu0 0
        %792 = vmatpush1.bf16.msra.mxu0 0
        %793 = vmatprep.subr.bf16.mxu0 0
        %794 = vmatpush1.bf16.msra.mxu0 0
        %795 = vmatprep.subr.bf16.mxu0 0
        %796 = vmatpush1.bf16.msra.mxu0 0
        %797 = vmatprep.subr.bf16.mxu0 0
        %798 = vmatpush1.bf16.msra.mxu0 0
        %799 = vmatprep.mubr.bf16.mxu0 0
        %800 = vmatmul.mubr.bf16.gmra.mrb[0].mxu0 %v765
        %v801 = vpop.f32.mrb[0].mxu0
        %v802 = vadd.f32 0.0, %v801
        %v803 = vpop.f32.mrb[0].mxu0
        %v804 = vpop.f32.mrb[0].mxu0
        %v805 = vpop.f32.mrb[0].mxu0
        %806 = vdwg.mxu0
        %v807 = vadd.f32 %v743, %v802
        %v808 = vxor.u32 %v807, 2147483648
        %v809 = vmul.f32 %v808, 1.442695
        %v810 = vpow.pop %v809
        %v811 = vadd.f32 %v810, 1.0
        %v812 = vrcp.pop %v811
        %v813 = vmul.f32 1.0, %v812
        %v814 = vmul.f32 %v813, %v745
        %v815 = vpack.c.bf16 %v814, %v814
        %v816 = vld [vmem:[%s9] sm:$0xf]
        %v817 = vld [vmem:[%s9 + $0x4] sm:$0xf]
        %v818 = vld [vmem:[%s9 + $0x8] sm:$0xf]
        %v819 = vld [vmem:[%s9 + $0xc] sm:$0xf]
        %v824 = vunpack.c.l.b16 %v816
        %v825 = vunpack.c.l.b16 %v817
        %v826 = vunpack.c.l.b16 %v818
        %v827 = vunpack.c.l.b16 %v819
        %v828 = vpack.c.b16 %v825, %v824
        %v829 = vpack.c.b16 %v827, %v826
        %v833 = vsel %vm763, %v815, 0
        %835 = vmatprep.subr.bf16.mxu0 0
        %836 = vmatpush1.bf16.msra.mxu0 %v828
        %837 = vmatprep.subr.bf16.mxu0 0
        %838 = vmatpush1.bf16.msra.mxu0 %v829
        %839 = vmatprep.subr.bf16.mxu0 0
        %840 = vmatpush1.bf16.msra.mxu0 0
        %841 = vmatprep.subr.bf16.mxu0 0
        %842 = vmatpush1.bf16.msra.mxu0 0
        %843 = vmatprep.subr.bf16.mxu0 0
        %844 = vmatpush1.bf16.msra.mxu0 0
        %845 = vmatprep.subr.bf16.mxu0 0
        %846 = vmatpush1.bf16.msra.mxu0 0
        %847 = vmatprep.subr.bf16.mxu0 0
        %848 = vmatpush1.bf16.msra.mxu0 0
        %849 = vmatprep.subr.bf16.mxu0 0
        %850 = vmatpush1.bf16.msra.mxu0 0
        %851 = vmatprep.subr.bf16.mxu0 0
        %852 = vmatpush1.bf16.msra.mxu0 0
        %853 = vmatprep.subr.bf16.mxu0 0
        %854 = vmatpush1.bf16.msra.mxu0 0
        %855 = vmatprep.subr.bf16.mxu0 0
        %856 = vmatpush1.bf16.msra.mxu0 0
        %857 = vmatprep.subr.bf16.mxu0 0
        %858 = vmatpush1.bf16.msra.mxu0 0
        %859 = vmatprep.subr.bf16.mxu0 0
        %860 = vmatpush1.bf16.msra.mxu0 0
        %861 = vmatprep.subr.bf16.mxu0 0
        %862 = vmatpush1.bf16.msra.mxu0 0
        %863 = vmatprep.subr.bf16.mxu0 0
        %864 = vmatpush1.bf16.msra.mxu0 0
        %865 = vmatprep.subr.bf16.mxu0 0
        %866 = vmatpush1.bf16.msra.mxu0 0
        %867 = vmatprep.mubr.bf16.mxu0 0
        %868 = vmatmul.mubr.bf16.gmra.mrb[0].mxu0 %v833
        %v869 = vpop.f32.mrb[0].mxu0
        %v870 = vadd.f32 0.0, %v869
        %v871 = vpop.f32.mrb[0].mxu0
        %v872 = vpop.f32.mrb[0].mxu0
        %v873 = vpop.f32.mrb[0].mxu0
        %874 = vdwg.mxu0
        %876 = vrot.lane.b32.xlu0 %v870, 64
        %v877 = vpop.permute.xlu0 %876
        %v879 = vadd.f32 %v743, %v877
        %v880 = vtanh.pop %v879
        %v881 = vsub.f32 1.0, %v813
        %883 = vrot.lane.b32.xlu0 %v745, 32
        %v884 = vpop.permute.xlu0 %883
        %v886 = vmul.f32 %v881, %v884
        %888 = vrot.lane.b32.xlu0 %v880, 96
        %v889 = vpop.permute.xlu0 %888
        %v891 = vmul.f32 %v813, %v889
        %v892 = vadd.f32 %v886, %v891
        %894 = vrot.lane.b32.xlu0 %v892, 96
        %v895 = vpop.permute.xlu0 %894
        %vm897 = vcmask 257024
        %898 = vst.msk [vmem:[%s399] sm:$0xf] %vm897, %v895
        %v899 = vrot.slane %v892, 4
        %900 = vrot.lane.b32.xlu0 %v899, 96
        %v901 = vpop.permute.xlu0 %900
        %v903 = vmul.f32 %v584, %v901
        %v904 = vpack.c.bf16 %v903, %v903
        %v905 = vld [vmem:[%s8] sm:$0xf]
        %v906 = vld [vmem:[%s8 + $0x4] sm:$0xf]
        %v907 = vld [vmem:[%s8 + $0x8] sm:$0xf]
        %v908 = vld [vmem:[%s8 + $0xc] sm:$0xf]
        %v910 = vrot.slane %v904, 2
        %v915 = vunpack.c.l.b16 %v905
        %v916 = vunpack.c.l.b16 %v906
        %v917 = vunpack.c.l.b16 %v907
        %v918 = vunpack.c.l.b16 %v908
        %v919 = vpack.c.b16 %v916, %v915
        %v920 = vpack.c.b16 %v918, %v917
        %v924 = vsel %vm763, %v910, 0
        %926 = vmatprep.subr.bf16.mxu0 0
        %927 = vmatpush1.bf16.msra.mxu0 %v919
        %928 = vmatprep.subr.bf16.mxu0 0
        %929 = vmatpush1.bf16.msra.mxu0 %v920
        %930 = vmatprep.subr.bf16.mxu0 0
        %931 = vmatpush1.bf16.msra.mxu0 0
        %932 = vmatprep.subr.bf16.mxu0 0
        %933 = vmatpush1.bf16.msra.mxu0 0
        %934 = vmatprep.subr.bf16.mxu0 0
        %935 = vmatpush1.bf16.msra.mxu0 0
        %936 = vmatprep.subr.bf16.mxu0 0
        %937 = vmatpush1.bf16.msra.mxu0 0
        %938 = vmatprep.subr.bf16.mxu0 0
        %939 = vmatpush1.bf16.msra.mxu0 0
        %940 = vmatprep.subr.bf16.mxu0 0
        %941 = vmatpush1.bf16.msra.mxu0 0
        %942 = vmatprep.subr.bf16.mxu0 0
        %943 = vmatpush1.bf16.msra.mxu0 0
        %944 = vmatprep.subr.bf16.mxu0 0
        %945 = vmatpush1.bf16.msra.mxu0 0
        %946 = vmatprep.subr.bf16.mxu0 0
        %947 = vmatpush1.bf16.msra.mxu0 0
        %948 = vmatprep.subr.bf16.mxu0 0
        %949 = vmatpush1.bf16.msra.mxu0 0
        %950 = vmatprep.subr.bf16.mxu0 0
        %951 = vmatpush1.bf16.msra.mxu0 0
        %952 = vmatprep.subr.bf16.mxu0 0
        %953 = vmatpush1.bf16.msra.mxu0 0
        %954 = vmatprep.subr.bf16.mxu0 0
        %955 = vmatpush1.bf16.msra.mxu0 0
        %956 = vmatprep.subr.bf16.mxu0 0
        %957 = vmatpush1.bf16.msra.mxu0 0
        %958 = vmatprep.mubr.bf16.mxu0 0
        %959 = vmatmul.mubr.bf16.gmra.mrb[0].mxu0 %v924
        %v960 = vpop.f32.mrb[0].mxu0
        %v961 = vadd.f32 0.0, %v960
        %v962 = vpop.f32.mrb[0].mxu0
        %v963 = vpop.f32.mrb[0].mxu0
        %v964 = vpop.f32.mrb[0].mxu0
        %965 = vdwg.mxu0
        %v967 = vrot.slane %v961, 4
        %v969 = vadd.f32 %v743, %v967
        %v970 = vxor.u32 %v969, 2147483648
        %v971 = vmul.f32 %v970, 1.442695
        %v972 = vpow.pop %v971
        %v973 = vadd.f32 %v972, 1.0
        %v974 = vrcp.pop %v973
        %v975 = vmul.f32 1.0, %v974
        %v976 = vmul.f32 %v975, %v903
        %v977 = vpack.c.bf16 %v976, %v976
        %v978 = vld [vmem:[%s9] sm:$0xf]
        %v979 = vld [vmem:[%s9 + $0x4] sm:$0xf]
        %v980 = vld [vmem:[%s9 + $0x8] sm:$0xf]
        %v981 = vld [vmem:[%s9 + $0xc] sm:$0xf]
        %v983 = vrot.slane %v977, 2
        %v988 = vunpack.c.l.b16 %v978
        %v989 = vunpack.c.l.b16 %v979
        %v990 = vunpack.c.l.b16 %v980
        %v991 = vunpack.c.l.b16 %v981
        %v992 = vpack.c.b16 %v989, %v988
        %v993 = vpack.c.b16 %v991, %v990
        %v997 = vsel %vm763, %v983, 0
        %999 = vmatprep.subr.bf16.mxu0 0
        %1000 = vmatpush1.bf16.msra.mxu0 %v992
        %1001 = vmatprep.subr.bf16.mxu0 0
        %1002 = vmatpush1.bf16.msra.mxu0 %v993
        %1003 = vmatprep.subr.bf16.mxu0 0
        %1004 = vmatpush1.bf16.msra.mxu0 0
        %1005 = vmatprep.subr.bf16.mxu0 0
        %1006 = vmatpush1.bf16.msra.mxu0 0
        %1007 = vmatprep.subr.bf16.mxu0 0
        %1008 = vmatpush1.bf16.msra.mxu0 0
        %1009 = vmatprep.subr.bf16.mxu0 0
        %1010 = vmatpush1.bf16.msra.mxu0 0
        %1011 = vmatprep.subr.bf16.mxu0 0
        %1012 = vmatpush1.bf16.msra.mxu0 0
        %1013 = vmatprep.subr.bf16.mxu0 0
        %1014 = vmatpush1.bf16.msra.mxu0 0
        %1015 = vmatprep.subr.bf16.mxu0 0
        %1016 = vmatpush1.bf16.msra.mxu0 0
        %1017 = vmatprep.subr.bf16.mxu0 0
        %1018 = vmatpush1.bf16.msra.mxu0 0
        %1019 = vmatprep.subr.bf16.mxu0 0
        %1020 = vmatpush1.bf16.msra.mxu0 0
        %1021 = vmatprep.subr.bf16.mxu0 0
        %1022 = vmatpush1.bf16.msra.mxu0 0
        %1023 = vmatprep.subr.bf16.mxu0 0
        %1024 = vmatpush1.bf16.msra.mxu0 0
        %1025 = vmatprep.subr.bf16.mxu0 0
        %1026 = vmatpush1.bf16.msra.mxu0 0
        %1027 = vmatprep.subr.bf16.mxu0 0
        %1028 = vmatpush1.bf16.msra.mxu0 0
        %1029 = vmatprep.subr.bf16.mxu0 0
        %1030 = vmatpush1.bf16.msra.mxu0 0
        %1031 = vmatprep.mubr.bf16.mxu0 0
        %1032 = vmatmul.mubr.bf16.gmra.mrb[0].mxu0 %v997
        %v1033 = vpop.f32.mrb[0].mxu0
        %v1034 = vadd.f32 0.0, %v1033
        %v1035 = vpop.f32.mrb[0].mxu0
        %v1036 = vpop.f32.mrb[0].mxu0
        %v1037 = vpop.f32.mrb[0].mxu0
        %1038 = vdwg.mxu0
        %v1040 = vrot.slane %v1034, 4
        %1041 = vrot.lane.b32.xlu0 %v1040, 64
        %v1042 = vpop.permute.xlu0 %1041
        %v1044 = vadd.f32 %v743, %v1042
        %v1045 = vtanh.pop %v1044
        %v1046 = vsub.f32 1.0, %v975
        %1048 = vrot.lane.b32.xlu0 %v903, 32
        %v1049 = vpop.permute.xlu0 %1048
        %v1051 = vmul.f32 %v1046, %v1049
        %1053 = vrot.lane.b32.xlu0 %v1045, 96
        %v1054 = vpop.permute.xlu0 %1053
        %v1056 = vmul.f32 %v975, %v1054
        %v1057 = vadd.f32 %v1051, %v1056
        %1059 = vrot.lane.b32.xlu0 %v1057, 96
        %v1060 = vpop.permute.xlu0 %1059
        %s1062 = scalar_lea.vmem %s399, 4 [#allocation8]
        %vm1063 = vcmask 261124
        %1064 = vst.msk [vmem:[%s1062 - $0x4] sm:$0xf0] %vm1063, %v1060
        %1065 = vst.msk [vmem:[#allocation2 - $0x4] sm:$0xf0] %vm1063, %v1060
        %s1066 = sand.u32 %s247, 1
        %s1067 = scalar_lea.sflag [#allocation9], %s1066
        %s1068 = sand.u32 %s247, 1
        %s1069 = smul.addr %s1068, 8
        %s1070 = scalar_lea.vmem [#allocation8], %s1069
        // Predicated region
        $region103: #{tpu_custom_call.1} parent=93 // pred_check
          %p1071 = pneg %p257
        $region104: #{tpu_custom_call.1} parent=93 // pred_check_branch
          %1073 = sbr.rel (%p1071) target = $region106
        $region105: #{tpu_custom_call.1} parent=93 // pred_region
          %s1074 = smul.u32 2, %s24
          %s1076 = ssub.s32 128, 128
          %1077 = vsyncadd %s1067, %s1076
          %s1078 = smul.addr %s1074, 64
          %s1079 = scalar_lea.hbm %s10, %s1078
          %s1080 = sshll.u32 %s1070, 4
          %s1081 = int_to_ptr.vmem [resolvable:$true] %s1080
          %1086 = dma.vmem_to_hbm [thread:$0]  %s1081, 128, %s1079, %s1067, 64, 64, 4
        $region106: #{tpu_custom_call.1} parent=93 // pred_fallthru
          _
      $region94: #{tpu_custom_call.1} parent=5 // pred_fallthru
        _
      %p1087 = scmp.le.s32.totalorder 2, %s19
      // Predicated region
      $region107: #{tpu_custom_call.1} parent=5 // pred_check
        %p1088 = pneg %p1087
      $region108: #{tpu_custom_call.1} parent=5 // pred_check_branch
        %1090 = sbr.rel (%p1088) target = $region110
      $region109: #{tpu_custom_call.1} parent=5 // pred_region
        %s1091 = ssub.s32 %s19, 2
        // Predicated region
        $region111: #{tpu_custom_call.1} parent=109 // pred_check
          %p1092 = pneg %p263
        $region112: #{tpu_custom_call.1} parent=109 // pred_check_branch
          %1094 = sbr.rel (%p1092) target = $region114
        $region113: #{tpu_custom_call.1} parent=109 // pred_region
          %s1095 = sand.u32 %s248, 1
          %s1096 = scalar_lea.sflag [#allocation9], %s1095
          %s1097 = sand.u32 %s248, 1
          %s1098 = smul.addr %s1097, 8
          %s1099 = scalar_lea.vmem [#allocation8], %s1098
          %1100 = dma.done %s1096, 128
        $region114: #{tpu_custom_call.1} parent=109 // pred_fallthru
          _
      $region110: #{tpu_custom_call.1} parent=5 // pred_fallthru
        _
    $region6: #{tpu_custom_call.1} parent=1 // loop_footer
      %s23 = sadd.s32 1, %s19
    $region7: #{tpu_custom_call.1} parent=1 // loop_footer_branch
      %18 = sbr.rel target = $region3
    $region8: #{tpu_custom_call.1} parent=1 // loop_exit
      _
    %1101 = vsyncpa [#allocation9], 1
    %s1102 = scalar_lea.sflag [#allocation9], 1
    %1103 = vsyncpa %s1102, 1

</llo_original>
